<compile_context>
chip_gen: v6e
topology: v6e:2x2x1
jax: 0.10.0
libtpu: 0.0.40
codegen_flags: <defaults>
</compile_context>

<pallas_src>
import functools

import jax
import jax.numpy as jnp
from jax.experimental import pallas as pl
from jax.experimental.pallas import tpu as pltpu


# ---------------------------------------------------------------------------
# Kernels
# ---------------------------------------------------------------------------

def _mlp_kernel_resident(x_ref, w1_ref, b1_ref, w2_ref, b2_ref, w3_ref, b3_ref,
                         o_ref):
    """Fused 3-layer MLP for one batch tile; all weights grid-invariant in VMEM.

    MXU matmuls run in the weights' dtype (bf16) with f32 accumulation;
    bias add and ReLU stay in f32 on the VPU.
    """
    cdt = w1_ref.dtype
    x = x_ref[...].astype(cdt)
    h1 = jnp.dot(x, w1_ref[...], preferred_element_type=jnp.float32) + b1_ref[...]
    h1 = jnp.maximum(h1, 0.0).astype(cdt)
    h2 = jnp.dot(h1, w2_ref[...], preferred_element_type=jnp.float32) + b2_ref[...]
    h2 = jnp.maximum(h2, 0.0).astype(cdt)
    y = jnp.dot(h2, w3_ref[...], preferred_element_type=jnp.float32) + b3_ref[...]
    o_ref[...] = y.astype(o_ref.dtype)


def _mlp_kernel_overlap(x_ref, w1_ref, b1_ref, w2_hbm, b2_hbm, w3_hbm, b3_hbm,
                        o_ref, w2_buf, b2_buf, w3_buf, b3_buf, sems):
    """Single-grid-step variant: layer-2/3 weights stay in HBM (pl.ANY) and are
    DMA'd manually so their load overlaps the layer-1 matmul (no auto
    pipelining exists when grid == (1,))."""
    w2_cp = pltpu.make_async_copy(w2_hbm, w2_buf, sems.at[0])
    b2_cp = pltpu.make_async_copy(b2_hbm, b2_buf, sems.at[1])
    w3_cp = pltpu.make_async_copy(w3_hbm, w3_buf, sems.at[2])
    b3_cp = pltpu.make_async_copy(b3_hbm, b3_buf, sems.at[3])
    w2_cp.start()
    b2_cp.start()
    w3_cp.start()
    b3_cp.start()

    cdt = w1_ref.dtype
    x = x_ref[...].astype(cdt)
    h1 = jnp.dot(x, w1_ref[...], preferred_element_type=jnp.float32) + b1_ref[...]
    h1 = jnp.maximum(h1, 0.0).astype(cdt)

    w2_cp.wait()
    b2_cp.wait()
    h2 = jnp.dot(h1, w2_buf[...], preferred_element_type=jnp.float32) + b2_buf[...]
    h2 = jnp.maximum(h2, 0.0).astype(cdt)

    w3_cp.wait()
    b3_cp.wait()
    y = jnp.dot(h2, w3_buf[...], preferred_element_type=jnp.float32) + b3_buf[...]
    o_ref[...] = y.astype(o_ref.dtype)


# ---------------------------------------------------------------------------
# Wrapper
# ---------------------------------------------------------------------------

def _round_up(n, m):
    return ((n + m - 1) // m) * m


@functools.lru_cache(maxsize=1)
def _tpu_generation():
    kind = jax.devices()[0].device_kind.lower()
    for g in (7, 6, 5):
        if f"v{g}" in kind:
            return g
    return 0


def _choose_tile_b(B, gen):
    if gen >= 7 and 64 < B <= 128:
        # Two grid steps so both v7x TensorCores get work.
        return _round_up(-(-B // 2), 8)
    if B <= 128:
        return _round_up(max(B, 8), 8)
    if B <= 512:
        # v6e/v5e: 256-row tiles fill the MXU and halve per-step overhead on a
        # single TensorCore; v7x keeps 128 so >=2 grid steps shard across TCs.
        return 128 if gen >= 7 else 256
    if B < 1024:
        return 256
    return 512


def prepare_params(params, *, use_bf16=True):
    """Cast weights to the MXU compute dtype ONCE (hoisted out of the per-call
    hot path) and reshape biases to (1, N) f32."""
    w1, b1, w2, b2, w3, b3 = params
    cdt = jnp.bfloat16 if use_bf16 else jnp.float32
    return (w1.astype(cdt), b1.reshape(1, -1).astype(jnp.float32),
            w2.astype(cdt), b2.reshape(1, -1).astype(jnp.float32),
            w3.astype(cdt), b3.reshape(1, -1).astype(jnp.float32))


@functools.partial(jax.jit, static_argnames=("out_dtype",))
def _predictor_forward_jit(x, prepared_params, out_dtype):
    w1, b1, w2, b2, w3, b3 = prepared_params
    B, D_in = x.shape
    H = w1.shape[1]
    D_out = w3.shape[1]
    out_dtype = x.dtype if out_dtype is None else jnp.dtype(out_dtype)

    gen = _tpu_generation()
    tile_b = _choose_tile_b(B, gen)
    B_pad = _round_up(B, tile_b)
    x_pad = x if B_pad == B else jnp.pad(x, ((0, B_pad - B), (0, 0)))
    num_tiles = B_pad // tile_b

    w_bytes = jnp.dtype(w1.dtype).itemsize
    cost = pl.CostEstimate(
        flops=2 * B_pad * (D_in * H + H * H + H * D_out),
        transcendentals=0,
        bytes_accessed=(B_pad * D_in * jnp.dtype(x.dtype).itemsize
                        + B_pad * D_out * jnp.dtype(out_dtype).itemsize
                        + (D_in * H + H * H + H * D_out) * w_bytes
                        + (2 * H + D_out) * 4),
    )
    compiler_params = pltpu.CompilerParams(
        dimension_semantics=("parallel",),
        vmem_limit_bytes=(48 << 20) if tile_b >= 512 else None,
    )

    if num_tiles == 1:
        # Single grid step: hide the layer-2/3 weight load under layer-1 work.
        y = pl.pallas_call(
            _mlp_kernel_overlap,
            out_shape=jax.ShapeDtypeStruct((B_pad, D_out), out_dtype),
            grid_spec=pltpu.PrefetchScalarGridSpec(
                num_scalar_prefetch=0,
                grid=(1,),
                in_specs=[
                    pl.BlockSpec((tile_b, D_in), lambda i: (0, 0)),  # x
                    pl.BlockSpec((D_in, H), lambda i: (0, 0)),       # w1
                    pl.BlockSpec((1, H), lambda i: (0, 0)),          # b1
                    pl.BlockSpec(memory_space=pl.ANY),               # w2 (HBM)
                    pl.BlockSpec(memory_space=pl.ANY),               # b2 (HBM)
                    pl.BlockSpec(memory_space=pl.ANY),               # w3 (HBM)
                    pl.BlockSpec(memory_space=pl.ANY),               # b3 (HBM)
                ],
                out_specs=pl.BlockSpec((tile_b, D_out), lambda i: (0, 0)),
                scratch_shapes=[
                    pltpu.VMEM((H, H), w2.dtype),
                    pltpu.VMEM((1, H), b2.dtype),
                    pltpu.VMEM((H, D_out), w3.dtype),
                    pltpu.VMEM((1, D_out), b3.dtype),
                    pltpu.SemaphoreType.DMA((4,)),
                ],
            ),
            compiler_params=compiler_params,
            cost_estimate=cost,
        )(x_pad, w1, b1, w2, b2, w3, b3)
    else:
        # Tiled batch: weights/biases are grid-invariant VMEM residents,
        # only the batch is pipelined; "parallel" lets megacore shard tiles.
        y = pl.pallas_call(
            _mlp_kernel_resident,
            out_shape=jax.ShapeDtypeStruct((B_pad, D_out), out_dtype),
            grid_spec=pltpu.PrefetchScalarGridSpec(
                num_scalar_prefetch=0,
                grid=(num_tiles,),
                in_specs=[
                    pl.BlockSpec((tile_b, D_in), lambda i: (i, 0)),  # x tile
                    pl.BlockSpec((D_in, H), lambda i: (0, 0)),       # w1
                    pl.BlockSpec((1, H), lambda i: (0, 0)),          # b1
                    pl.BlockSpec((H, H), lambda i: (0, 0)),          # w2
                    pl.BlockSpec((1, H), lambda i: (0, 0)),          # b2
                    pl.BlockSpec((H, D_out), lambda i: (0, 0)),      # w3
                    pl.BlockSpec((1, D_out), lambda i: (0, 0)),      # b3
                ],
                out_specs=pl.BlockSpec((tile_b, D_out), lambda i: (i, 0)),
            ),
            compiler_params=compiler_params,
            cost_estimate=cost,
        )(x_pad, w1, b1, w2, b2, w3, b3)

    return y if B_pad == B else y[:B]


def predictor_forward(x, prepared_params, *, out_dtype=None):
    """x: [B, representation_dim + action_dim] -> [B, representation_dim].

    `prepared_params` must come from prepare_params() (weights cached in bf16).
    `out_dtype=jnp.bfloat16` can be used to cut output HBM traffic on v6e when
    the consumer tolerates bf16; default preserves the input dtype (f32).
    """
    return _predictor_forward_jit(x, prepared_params, out_dtype=out_dtype)


# ---------------------------------------------------------------------------
# Parameter init + references
# ---------------------------------------------------------------------------

def init_params(key, representation_dim=512, action_dim=0, hidden=512):
    """Deterministic synthetic parameters (PyTorch-Linear-like uniform init),
    stored as [in, out] so the kernel does x @ W + b."""
    d_in = representation_dim + action_dim
    keys = jax.random.split(key, 6)

    def lin(kw, kb, fan_in, fan_out):
        bound = 1.0 / jnp.sqrt(fan_in)
        w = jax.random.uniform(kw, (fan_in, fan_out), jnp.float32, -bound, bound)
        b = jax.random.uniform(kb, (fan_out,), jnp.float32, -bound, bound)
        return w, b

    w1, b1 = lin(keys[0], keys[1], d_in, hidden)
    w2, b2 = lin(keys[2], keys[3], hidden, hidden)
    w3, b3 = lin(keys[4], keys[5], hidden, representation_dim)
    return (w1, b1, w2, b2, w3, b3)


def _reference_f32(x, params):
    w1, b1, w2, b2, w3, b3 = params
    h = jnp.maximum(x @ w1 + b1, 0.0)
    h = jnp.maximum(h @ w2 + b2, 0.0)
    return h @ w3 + b3


def _reference_matched(x, params, compute_dtype):
    """Same precision recipe as the kernel: bf16 matmul inputs, f32 accumulation,
    f32 bias/ReLU."""
    w1, b1, w2, b2, w3, b3 = params

    def lin(a, w, b):
        return jnp.dot(a.astype(compute_dtype), w.astype(compute_dtype),
                       preferred_element_type=jnp.float32) + b

    h = jnp.maximum(lin(x, w1, b1), 0.0)
    h = jnp.maximum(lin(h, w2, b2), 0.0)
    return lin(h, w3, b3)


if __name__ == "__main__":
    representation_dim = 512   # module default; hidden width 512 fixed by spec
    action_dim = 0

    key = jax.random.PRNGKey(0)
    k_x, k_p = jax.random.split(key)
    params = init_params(k_p, representation_dim, action_dim)
    prepared = prepare_params(params, use_bf16=True)   # cast once, reuse

    # batch=6 exercises the single-block path (manual weight-DMA overlap,
    # padding 6 -> 8 rows); batch=384 exercises the tiled resident-weight path
    # on every TPU generation.
    for batch in (6, 384):
        xk = jax.random.fold_in(k_x, batch)
        x = jax.random.normal(xk, (batch, representation_dim + action_dim),
                              jnp.float32)

        y = jax.block_until_ready(predictor_forward(x, prepared))
        assert y.shape == (batch, representation_dim)
        assert bool(jnp.all(jnp.isfinite(y)))

        y_matched = _reference_matched(x, params, jnp.bfloat16)
        assert jnp.allclose(y, y_matched, atol=2e-3, rtol=2e-3), \
            "mismatch vs matched-precision reference"

        y_f32 = _reference_f32(x, params)
        assert jnp.allclose(y, y_f32, atol=5e-2, rtol=5e-2), \
            "mismatch vs f32 reference"

    print("KERNEL_OK")
</pallas_src>

<mosaic_0001>
module attributes {stable_mosaic.version = 11 : i64} {
  func.func @_mlp_kernel_overlap(%arg0: i32, %arg1: memref<8x512xf32, #tpu.memory_space<vmem>>, %arg2: memref<512x512xbf16, #tpu.memory_space<vmem>>, %arg3: memref<1x512xf32, #tpu.memory_space<vmem>>, %arg4: memref<512x512xbf16, #tpu.memory_space<any>>, %arg5: memref<1x512xf32, #tpu.memory_space<any>>, %arg6: memref<512x512xbf16, #tpu.memory_space<any>>, %arg7: memref<1x512xf32, #tpu.memory_space<any>>, %arg8: memref<8x512xf32, #tpu.memory_space<vmem>>, %arg9: memref<512x512xbf16, #tpu.memory_space<vmem>>, %arg10: memref<1x512xf32, #tpu.memory_space<vmem>>, %arg11: memref<512x512xbf16, #tpu.memory_space<vmem>>, %arg12: memref<1x512xf32, #tpu.memory_space<vmem>>, %arg13: memref<4x!tpu.dma_semaphore, #tpu.memory_space<semaphore_mem>>) attributes {dimension_semantics = [#tpu.dimension_semantics<parallel>], iteration_bounds = array<i64: 1>, scalar_prefetch = 0 : i64, scratch_operands = 5 : i64, tpu.core_type = #tpu.core_type<tc>, window_params = [{pipeline_mode = #tpu.pipeline_mode<synchronous>, transform_indices = @transform_0, window_bounds = array<i64: 8, 512>}, {pipeline_mode = #tpu.pipeline_mode<synchronous>, transform_indices = @transform_1, window_bounds = array<i64: 512, 512>}, {pipeline_mode = #tpu.pipeline_mode<synchronous>, transform_indices = @transform_2, window_bounds = array<i64: 1, 512>}, {}, {}, {}, {}, {pipeline_mode = #tpu.pipeline_mode<synchronous>, transform_indices = @transform_7, window_bounds = array<i64: 8, 512>}]} {
    %c0_i32 = arith.constant 0 : i32
    %0 = tpu.memref_slice %arg13[%c0_i32] : memref<4x!tpu.dma_semaphore, #tpu.memory_space<semaphore_mem>> -> memref<1x!tpu.dma_semaphore, #tpu.memory_space<semaphore_mem>>
    %1 = tpu.memref_squeeze %0 : memref<1x!tpu.dma_semaphore, #tpu.memory_space<semaphore_mem>> -> memref<!tpu.dma_semaphore, #tpu.memory_space<semaphore_mem>>
    tpu.enqueue_dma source(%arg4 : memref<512x512xbf16, #tpu.memory_space<any>>) target(%arg9 : memref<512x512xbf16, #tpu.memory_space<vmem>>) target_semaphore(%1 : memref<!tpu.dma_semaphore, #tpu.memory_space<semaphore_mem>>)
    %c1_i32 = arith.constant 1 : i32
    %2 = tpu.memref_slice %arg13[%c1_i32] : memref<4x!tpu.dma_semaphore, #tpu.memory_space<semaphore_mem>> -> memref<1x!tpu.dma_semaphore, #tpu.memory_space<semaphore_mem>>
    %3 = tpu.memref_squeeze %2 : memref<1x!tpu.dma_semaphore, #tpu.memory_space<semaphore_mem>> -> memref<!tpu.dma_semaphore, #tpu.memory_space<semaphore_mem>>
    tpu.enqueue_dma source(%arg5 : memref<1x512xf32, #tpu.memory_space<any>>) target(%arg10 : memref<1x512xf32, #tpu.memory_space<vmem>>) target_semaphore(%3 : memref<!tpu.dma_semaphore, #tpu.memory_space<semaphore_mem>>)
    %c2_i32 = arith.constant 2 : i32
    %4 = tpu.memref_slice %arg13[%c2_i32] : memref<4x!tpu.dma_semaphore, #tpu.memory_space<semaphore_mem>> -> memref<1x!tpu.dma_semaphore, #tpu.memory_space<semaphore_mem>>
    %5 = tpu.memref_squeeze %4 : memref<1x!tpu.dma_semaphore, #tpu.memory_space<semaphore_mem>> -> memref<!tpu.dma_semaphore, #tpu.memory_space<semaphore_mem>>
    tpu.enqueue_dma source(%arg6 : memref<512x512xbf16, #tpu.memory_space<any>>) target(%arg11 : memref<512x512xbf16, #tpu.memory_space<vmem>>) target_semaphore(%5 : memref<!tpu.dma_semaphore, #tpu.memory_space<semaphore_mem>>)
    %c3_i32 = arith.constant 3 : i32
    %6 = tpu.memref_slice %arg13[%c3_i32] : memref<4x!tpu.dma_semaphore, #tpu.memory_space<semaphore_mem>> -> memref<1x!tpu.dma_semaphore, #tpu.memory_space<semaphore_mem>>
    %7 = tpu.memref_squeeze %6 : memref<1x!tpu.dma_semaphore, #tpu.memory_space<semaphore_mem>> -> memref<!tpu.dma_semaphore, #tpu.memory_space<semaphore_mem>>
    tpu.enqueue_dma source(%arg7 : memref<1x512xf32, #tpu.memory_space<any>>) target(%arg12 : memref<1x512xf32, #tpu.memory_space<vmem>>) target_semaphore(%7 : memref<!tpu.dma_semaphore, #tpu.memory_space<semaphore_mem>>)
    %c0 = arith.constant 0 : index
    %c0_0 = arith.constant 0 : index
    %8 = vector.load %arg1[%c0, %c0_0] : memref<8x512xf32, #tpu.memory_space<vmem>>, vector<8x512xf32>
    %9 = arith.truncf %8 : vector<8x512xf32> to vector<8x512xbf16>
    %c0_1 = arith.constant 0 : index
    %c0_2 = arith.constant 0 : index
    %10 = vector.load %arg2[%c0_1, %c0_2] : memref<512x512xbf16, #tpu.memory_space<vmem>>, vector<512x512xbf16>
    %cst = arith.constant dense<0.000000e+00> : vector<8x512xf32>
    %11 = tpu.matmul %9, %10, %cst {dimension_numbers = #tpu.dot_dimension_numbers<[1], [0], [0], [1], [0, 0, 1, 1], [], []>} : vector<8x512xbf16>, vector<512x512xbf16>, vector<8x512xf32> -> vector<8x512xf32>
    %c0_3 = arith.constant 0 : index
    %c0_4 = arith.constant 0 : index
    %12 = vector.load %arg3[%c0_3, %c0_4] : memref<1x512xf32, #tpu.memory_space<vmem>>, vector<1x512xf32>
    %13 = vector.broadcast %12 : vector<1x512xf32> to vector<8x512xf32>
    %14 = arith.addf %11, %13 : vector<8x512xf32>
    %cst_5 = arith.constant 0.000000e+00 : f32
    %15 = vector.broadcast %cst_5 : f32 to vector<8x512xf32>
    %16 = arith.maximumf %14, %15 : vector<8x512xf32>
    %17 = arith.truncf %16 : vector<8x512xf32> to vector<8x512xbf16>
    %c0_i32_6 = arith.constant 0 : i32
    %18 = tpu.memref_slice %arg13[%c0_i32_6] : memref<4x!tpu.dma_semaphore, #tpu.memory_space<semaphore_mem>> -> memref<1x!tpu.dma_semaphore, #tpu.memory_space<semaphore_mem>>
    %19 = tpu.memref_squeeze %18 : memref<1x!tpu.dma_semaphore, #tpu.memory_space<semaphore_mem>> -> memref<!tpu.dma_semaphore, #tpu.memory_space<semaphore_mem>>
    tpu.wait_dma2 semaphore(%19 : memref<!tpu.dma_semaphore, #tpu.memory_space<semaphore_mem>>) src(%arg4 : memref<512x512xbf16, #tpu.memory_space<any>>) dst(%arg9 : memref<512x512xbf16, #tpu.memory_space<vmem>>)
    %c1_i32_7 = arith.constant 1 : i32
    %20 = tpu.memref_slice %arg13[%c1_i32_7] : memref<4x!tpu.dma_semaphore, #tpu.memory_space<semaphore_mem>> -> memref<1x!tpu.dma_semaphore, #tpu.memory_space<semaphore_mem>>
    %21 = tpu.memref_squeeze %20 : memref<1x!tpu.dma_semaphore, #tpu.memory_space<semaphore_mem>> -> memref<!tpu.dma_semaphore, #tpu.memory_space<semaphore_mem>>
    tpu.wait_dma2 semaphore(%21 : memref<!tpu.dma_semaphore, #tpu.memory_space<semaphore_mem>>) src(%arg5 : memref<1x512xf32, #tpu.memory_space<any>>) dst(%arg10 : memref<1x512xf32, #tpu.memory_space<vmem>>)
    %c0_8 = arith.constant 0 : index
    %c0_9 = arith.constant 0 : index
    %22 = vector.load %arg9[%c0_8, %c0_9] : memref<512x512xbf16, #tpu.memory_space<vmem>>, vector<512x512xbf16>
    %cst_10 = arith.constant dense<0.000000e+00> : vector<8x512xf32>
    %23 = tpu.matmul %17, %22, %cst_10 {dimension_numbers = #tpu.dot_dimension_numbers<[1], [0], [0], [1], [0, 0, 1, 1], [], []>} : vector<8x512xbf16>, vector<512x512xbf16>, vector<8x512xf32> -> vector<8x512xf32>
    %c0_11 = arith.constant 0 : index
    %c0_12 = arith.constant 0 : index
    %24 = vector.load %arg10[%c0_11, %c0_12] : memref<1x512xf32, #tpu.memory_space<vmem>>, vector<1x512xf32>
    %25 = vector.broadcast %24 : vector<1x512xf32> to vector<8x512xf32>
    %26 = arith.addf %23, %25 : vector<8x512xf32>
    %cst_13 = arith.constant 0.000000e+00 : f32
    %27 = vector.broadcast %cst_13 : f32 to vector<8x512xf32>
    %28 = arith.maximumf %26, %27 : vector<8x512xf32>
    %29 = arith.truncf %28 : vector<8x512xf32> to vector<8x512xbf16>
    %c2_i32_14 = arith.constant 2 : i32
    %30 = tpu.memref_slice %arg13[%c2_i32_14] : memref<4x!tpu.dma_semaphore, #tpu.memory_space<semaphore_mem>> -> memref<1x!tpu.dma_semaphore, #tpu.memory_space<semaphore_mem>>
    %31 = tpu.memref_squeeze %30 : memref<1x!tpu.dma_semaphore, #tpu.memory_space<semaphore_mem>> -> memref<!tpu.dma_semaphore, #tpu.memory_space<semaphore_mem>>
    tpu.wait_dma2 semaphore(%31 : memref<!tpu.dma_semaphore, #tpu.memory_space<semaphore_mem>>) src(%arg6 : memref<512x512xbf16, #tpu.memory_space<any>>) dst(%arg11 : memref<512x512xbf16, #tpu.memory_space<vmem>>)
    %c3_i32_15 = arith.constant 3 : i32
    %32 = tpu.memref_slice %arg13[%c3_i32_15] : memref<4x!tpu.dma_semaphore, #tpu.memory_space<semaphore_mem>> -> memref<1x!tpu.dma_semaphore, #tpu.memory_space<semaphore_mem>>
    %33 = tpu.memref_squeeze %32 : memref<1x!tpu.dma_semaphore, #tpu.memory_space<semaphore_mem>> -> memref<!tpu.dma_semaphore, #tpu.memory_space<semaphore_mem>>
    tpu.wait_dma2 semaphore(%33 : memref<!tpu.dma_semaphore, #tpu.memory_space<semaphore_mem>>) src(%arg7 : memref<1x512xf32, #tpu.memory_space<any>>) dst(%arg12 : memref<1x512xf32, #tpu.memory_space<vmem>>)
    %c0_16 = arith.constant 0 : index
    %c0_17 = arith.constant 0 : index
    %34 = vector.load %arg11[%c0_16, %c0_17] : memref<512x512xbf16, #tpu.memory_space<vmem>>, vector<512x512xbf16>
    %cst_18 = arith.constant dense<0.000000e+00> : vector<8x512xf32>
    %35 = tpu.matmul %29, %34, %cst_18 {dimension_numbers = #tpu.dot_dimension_numbers<[1], [0], [0], [1], [0, 0, 1, 1], [], []>} : vector<8x512xbf16>, vector<512x512xbf16>, vector<8x512xf32> -> vector<8x512xf32>
    %c0_19 = arith.constant 0 : index
    %c0_20 = arith.constant 0 : index
    %36 = vector.load %arg12[%c0_19, %c0_20] : memref<1x512xf32, #tpu.memory_space<vmem>>, vector<1x512xf32>
    %37 = vector.broadcast %36 : vector<1x512xf32> to vector<8x512xf32>
    %38 = arith.addf %35, %37 : vector<8x512xf32>
    %c0_21 = arith.constant 0 : index
    %c0_22 = arith.constant 0 : index
    %39 = vector.load %arg8[%c0_21, %c0_22] : memref<8x512xf32, #tpu.memory_space<vmem>>, vector<8x512xf32>
    tpu.vector_store %arg8[%c0_21, %c0_22], %38 {strides = array<i32>} : memref<8x512xf32, #tpu.memory_space<vmem>>, vector<8x512xf32>,
    return
  }
  func.func @transform_0(%arg0: i32) -> (i32, i32) {
    %c0_i32 = arith.constant 0 : i32
    %c0_i32_0 = arith.constant 0 : i32
    %c0_i32_1 = arith.constant 0 : i32
    return %c0_i32, %c0_i32_0 : i32, i32
  }
  func.func @transform_1(%arg0: i32) -> (i32, i32) {
    %c0_i32 = arith.constant 0 : i32
    %c0_i32_0 = arith.constant 0 : i32
    %c0_i32_1 = arith.constant 0 : i32
    return %c0_i32, %c0_i32_0 : i32, i32
  }
  func.func @transform_2(%arg0: i32) -> (i32, i32) {
    %c0_i32 = arith.constant 0 : i32
    %c0_i32_0 = arith.constant 0 : i32
    %c0_i32_1 = arith.constant 0 : i32
    return %c0_i32, %c0_i32_0 : i32, i32
  }
  func.func @transform_7(%arg0: i32) -> (i32, i32) {
    %c0_i32 = arith.constant 0 : i32
    %c0_i32_0 = arith.constant 0 : i32
    %c0_i32_1 = arith.constant 0 : i32
    return %c0_i32, %c0_i32_0 : i32, i32
  }
}

</mosaic_0001>

<llo_original>
// kernel: _predictor_forward_jit.1
$region0: #{_predictor_forward_jit.1}
  #allocation0 [shape = 'u32[]', space=smem, size = 0x4, offset = 0x4, fixed_abs, tag = 'smem constant byte address 0x4 - core index']
  #allocation1 [shape = 'u32[144,128]{1,0:T(1,128)}', space=vmem, size = 0x12000, scoped, tag = 'internal scratch']
  #allocation2 [shape = 'bf16[512,512]{1,0:T(8,128)(2,1)}', space=vmem, size = 0x80000, scoped, tag = 'scratch operand']
  #allocation3 [shape = 'f32[1,512]{1,0:T(1,128)}', space=vmem, size = 0x800, scoped, tag = 'scratch operand']
  #allocation4 [shape = 'bf16[512,512]{1,0:T(8,128)(2,1)}', space=vmem, size = 0x80000, scoped, tag = 'scratch operand']
  #allocation5 [shape = 'f32[1,512]{1,0:T(1,128)}', space=vmem, size = 0x800, scoped, tag = 'scratch operand']
  #allocation6 [shape = 's32[4]{0}', space=sflag, size = 0x10, scoped, tag = 'scratch operand']
  #allocation11 [shape = 's32[]', space=sflag, size = 0x4, offset = 0, fixed_abs, tag = 'sflag constant byte address 0x0 - dummy sync flag']
  #allocation12 [shape = 's32[]', space=sflag, size = 0x4, offset = 0, fixed_abs, tag = 'sflag constant byte address 0x0 - dummy sync flag']
  #allocation13 [shape = 'u32[]', space=smem, size = 0x4, offset = 0x44, fixed_abs, tag = 'smem constant byte address 0x44 - assertion arg 0']
  #allocation14 [shape = 'u32[]', space=smem, size = 0x4, offset = 0x48, fixed_abs, tag = 'smem constant byte address 0x48 - assertion arg 1']
  #allocation15 [shape = 's32[]', space=sflag, size = 0x4, offset = 0, fixed_abs, tag = 'sflag constant byte address 0x0 - dummy sync flag']
  #allocation16 [shape = 's32[]', space=sflag, size = 0x4, offset = 0, fixed_abs, tag = 'sflag constant byte address 0x0 - dummy sync flag']
  #allocation17 [shape = 's32[]', space=sflag, size = 0x4, offset = 0, fixed_abs, tag = 'sflag constant byte address 0x0 - dummy sync flag']
  #allocation18 [shape = 's32[]', space=sflag, size = 0x4, offset = 0, fixed_abs, tag = 'sflag constant byte address 0x0 - dummy sync flag']
  %s0 = inlined_call_operand.vmem [shape: f32[8,512], index: 0, kind: input, shape index: {}]
  %s1 = inlined_call_operand.hbm [shape: bf16[512,512], index: 1, kind: input, shape index: {}]
  %s2 = inlined_call_operand.vmem [shape: f32[1,512], index: 2, kind: input, shape index: {}]
  %s3 = inlined_call_operand.hbm [shape: bf16[512,512], index: 3, kind: input, shape index: {}]
  %s4 = inlined_call_operand.vmem [shape: f32[1,512], index: 4, kind: input, shape index: {}]
  %s5 = inlined_call_operand.hbm [shape: bf16[512,512], index: 5, kind: input, shape index: {}]
  %s6 = inlined_call_operand.vmem [shape: f32[1,512], index: 6, kind: input, shape index: {}]
  %s7 = inlined_call_operand.hbm [shape: f32[8,512], index: 7, kind: output, shape index: {}]
  %s8 = sld [smem:[#allocation0]]
  $region94: #{_predictor_forward_jit.1} parent=0
    _
  %s10 = ssub.s32 1, %s8
  %s11 = scalar_select 0, %s10, %s8
  $region1: #{_predictor_forward_jit.1} parent=0
    #allocation7 [shape = 'u8[524288]{0}', space=vmem, size = 0x80000, scoped, tag = 'input window, operand 1, single buffered']
    #allocation8 [shape = 's32[1]{0}', space=sflag, size = 0x4, scoped, tag = 'scoped memory for _predictor_forward_jit.1']
    #allocation9 [shape = 's32[1]{0}', space=sflag, size = 0x4, scoped, tag = 'scoped memory for _predictor_forward_jit.1']
    #allocation10 [shape = 'u8[16384]{0}', space=vmem, size = 0x4000, scoped, tag = 'output window, operand 0, single buffered']
    %12 = vsyncpa [#allocation8], 0
    %13 = vsyncpa [#allocation9], 0
    // Predicated region
    $region2: #{_predictor_forward_jit.1} parent=1 // pred_check
      _
    $region3: #{_predictor_forward_jit.1} parent=1 // pred_check_branch
      %15 = sbr.rel (0) target = $region5
    $region4: #{_predictor_forward_jit.1} parent=1 // pred_region
      _
    $region5: #{_predictor_forward_jit.1} parent=1 // pred_fallthru
      _
    // Predicated region
    $region6: #{_predictor_forward_jit.1} parent=1 // pred_check
      _
    $region7: #{_predictor_forward_jit.1} parent=1 // pred_check_branch
      %17 = sbr.rel (0) target = $region9
    $region8: #{_predictor_forward_jit.1} parent=1 // pred_region
      %s19 = ssub.s32 16384, 16384
      %20 = vsyncadd [#allocation8], %s19
      %s21 = sshll.u32 [#allocation7], 4
      %s22 = int_to_ptr.vmem [resolvable:$true] %s21
      %27 = dma.hbm_to_vmem [thread:$0]  %s1, 16384, %s22, [#allocation8], 256, 256, 16
    $region9: #{_predictor_forward_jit.1} parent=1 // pred_fallthru
      _
    // Predicated region
    $region10: #{_predictor_forward_jit.1} parent=1 // pred_check
      _
    $region11: #{_predictor_forward_jit.1} parent=1 // pred_check_branch
      %29 = sbr.rel (0) target = $region13
    $region12: #{_predictor_forward_jit.1} parent=1 // pred_region
      _
    $region13: #{_predictor_forward_jit.1} parent=1 // pred_fallthru
      _
    // Predicated region
    $region14: #{_predictor_forward_jit.1} parent=1 // pred_check
      _
    $region15: #{_predictor_forward_jit.1} parent=1 // pred_check_branch
      %31 = sbr.rel (0) target = $region17
    $region16: #{_predictor_forward_jit.1} parent=1 // pred_region
      %32 = dma.done [#allocation8], 16384
    $region17: #{_predictor_forward_jit.1} parent=1 // pred_fallthru
      _
    // Predicated region
    $region18: #{_predictor_forward_jit.1} parent=1 // pred_check
      _
    $region19: #{_predictor_forward_jit.1} parent=1 // pred_check_branch
      %34 = sbr.rel target = $region21
    $region20: #{_predictor_forward_jit.1} parent=1 // pred_region
      %35 = sst [smem:[#allocation13]] [#allocation12]
      %36 = sst [smem:[#allocation14]] [#allocation11]
    $region21: #{_predictor_forward_jit.1} parent=1 // pred_fallthru
      _
    %38 = shalt.err (0)
    %s40 = sshll.u32 [#allocation2], 4
    %s41 = int_to_ptr.vmem [resolvable:$true] %s40
    %43 = dma.hbm_to_vmem [thread:$0]  %s3, 16384, %s41, [#allocation6]
    %s44 = scalar_lea.sflag [#allocation6], 1
    %p46 = scmp.lt.u32.totalorder 4, 8
    %p47 = pneg %p46
    // Predicated region
    $region22: #{_predictor_forward_jit.1} parent=1 // pred_check
      _
    $region23: #{_predictor_forward_jit.1} parent=1 // pred_check_branch
      %49 = sbr.rel (%p46) target = $region25
    $region24: #{_predictor_forward_jit.1} parent=1 // pred_region
      %s65 = sand.u32 4, 7
      %p66 = scmp.eq.s32.totalorder %s65, 0
      %p67 = pneg %p66
      // Predicated region
      $region37: #{_predictor_forward_jit.1} parent=24 // pred_check
        _
      $region38: #{_predictor_forward_jit.1} parent=24 // pred_check_branch
        %69 = sbr.rel (%p66) target = $region40
      $region39: #{_predictor_forward_jit.1} parent=24 // pred_region
        %s70 = sand.u32 4, 7
        %s71 = ssub.s32 4, %s70
        %s72 = scalar_lea.vmem %s4, %s71
        %s73 = ssub.s32 4, %s70
        %s74 = scalar_lea.vmem [#allocation3], %s73
        %s75 = sshll.u32 1, %s70
        %s76 = ssub.s32 %s75, 1
        loop: start=0, step=1, limit=1
        $region41: #{_predictor_forward_jit.1} parent=39 // loop_pre_header
          _
        $region42: #{_predictor_forward_jit.1} parent=39 // loop_header
          %s78 = sphi 0, %s82
          %p79 = scmp.ge.s32.totalorder %s78, 1
          %s83 = sphi %s72, %s72
          %s84 = sphi %s74, %s74
        $region43: #{_predictor_forward_jit.1} parent=39 // loop_header_branch
          %81 = sbr.rel (%p79) target = $region47
        $region44: #{_predictor_forward_jit.1} parent=39 // loop_body
          %v85 = vld [vmem:[%s83] sm:%s76]
          %86 = vst [vmem:[%s84] sm:%s76] %v85
        $region45: #{_predictor_forward_jit.1} parent=39 // loop_footer
          %s82 = sadd.s32 1, %s78
        $region46: #{_predictor_forward_jit.1} parent=39 // loop_footer_branch
          %77 = sbr.rel target = $region42
        $region47: #{_predictor_forward_jit.1} parent=39 // loop_exit
          _
      $region40: #{_predictor_forward_jit.1} parent=24 // pred_fallthru
        _
    $region25: #{_predictor_forward_jit.1} parent=1 // pred_fallthru
      _
    // Predicated region
    $region26: #{_predictor_forward_jit.1} parent=1 // pred_check
      %p50 = pneg %p46
    $region27: #{_predictor_forward_jit.1} parent=1 // pred_check_branch
      %52 = sbr.rel (%p50) target = $region29
    $region28: #{_predictor_forward_jit.1} parent=1 // pred_region
      %s53 = sshll.u32 1, 4
      %s54 = ssub.s32 %s53, 1
      loop: start=0, step=1, limit=1
      $region30: #{_predictor_forward_jit.1} parent=28 // loop_pre_header
        _
      $region31: #{_predictor_forward_jit.1} parent=28 // loop_header
        %s56 = sphi 0, %s60
        %p57 = scmp.ge.s32.totalorder %s56, 1
        %s61 = sphi %s4, %s4
        %s62 = sphi [#allocation3], [#allocation3]
      $region32: #{_predictor_forward_jit.1} parent=28 // loop_header_branch
        %59 = sbr.rel (%p57) target = $region36
      $region33: #{_predictor_forward_jit.1} parent=28 // loop_body
        %v63 = vld [vmem:[%s61] sm:%s54]
        %64 = vst [vmem:[%s62] sm:%s54] %v63
      $region34: #{_predictor_forward_jit.1} parent=28 // loop_footer
        %s60 = sadd.s32 1, %s56
      $region35: #{_predictor_forward_jit.1} parent=28 // loop_footer_branch
        %55 = sbr.rel target = $region31
      $region36: #{_predictor_forward_jit.1} parent=28 // loop_exit
        _
    $region29: #{_predictor_forward_jit.1} parent=1 // pred_fallthru
      _
    // Predicated region
    $region48: #{_predictor_forward_jit.1} parent=1 // pred_check
      _
    $region49: #{_predictor_forward_jit.1} parent=1 // pred_check_branch
      %89 = sbr.rel (0) target = $region51
    $region50: #{_predictor_forward_jit.1} parent=1 // pred_region
      %90 = vsyncadd %s44, 64
    $region51: #{_predictor_forward_jit.1} parent=1 // pred_fallthru
      _
    %s91 = scalar_lea.sflag [#allocation6], 2
    // Predicated region
    $region52: #{_predictor_forward_jit.1} parent=1 // pred_check
      _
    $region53: #{_predictor_forward_jit.1} parent=1 // pred_check_branch
      %93 = sbr.rel target = $region55
    $region54: #{_predictor_forward_jit.1} parent=1 // pred_region
      %94 = sst [smem:[#allocation13]] [#allocation17]
      %95 = sst [smem:[#allocation14]] [#allocation16]
    $region55: #{_predictor_forward_jit.1} parent=1 // pred_fallthru
      _
    %97 = shalt.err (0)
    %s99 = sshll.u32 [#allocation4], 4
    %s100 = int_to_ptr.vmem [resolvable:$true] %s99
    %102 = dma.hbm_to_vmem [thread:$0]  %s5, 16384, %s100, %s91
    %s103 = scalar_lea.sflag [#allocation6], 3
    %p105 = scmp.lt.u32.totalorder 4, 8
    %p106 = pneg %p105
    // Predicated region
    $region56: #{_predictor_forward_jit.1} parent=1 // pred_check
      _
    $region57: #{_predictor_forward_jit.1} parent=1 // pred_check_branch
      %108 = sbr.rel (%p105) target = $region59
    $region58: #{_predictor_forward_jit.1} parent=1 // pred_region
      %s124 = sand.u32 4, 7
      %p125 = scmp.eq.s32.totalorder %s124, 0
      %p126 = pneg %p125
      // Predicated region
      $region71: #{_predictor_forward_jit.1} parent=58 // pred_check
        _
      $region72: #{_predictor_forward_jit.1} parent=58 // pred_check_branch
        %128 = sbr.rel (%p125) target = $region74
      $region73: #{_predictor_forward_jit.1} parent=58 // pred_region
        %s129 = sand.u32 4, 7
        %s130 = ssub.s32 4, %s129
        %s131 = scalar_lea.vmem %s6, %s130
        %s132 = ssub.s32 4, %s129
        %s133 = scalar_lea.vmem [#allocation5], %s132
        %s134 = sshll.u32 1, %s129
        %s135 = ssub.s32 %s134, 1
        loop: start=0, step=1, limit=1
        $region75: #{_predictor_forward_jit.1} parent=73 // loop_pre_header
          _
        $region76: #{_predictor_forward_jit.1} parent=73 // loop_header
          %s137 = sphi 0, %s141
          %p138 = scmp.ge.s32.totalorder %s137, 1
          %s142 = sphi %s131, %s131
          %s143 = sphi %s133, %s133
        $region77: #{_predictor_forward_jit.1} parent=73 // loop_header_branch
          %140 = sbr.rel (%p138) target = $region81
        $region78: #{_predictor_forward_jit.1} parent=73 // loop_body
          %v144 = vld [vmem:[%s142] sm:%s135]
          %145 = vst [vmem:[%s143] sm:%s135] %v144
        $region79: #{_predictor_forward_jit.1} parent=73 // loop_footer
          %s141 = sadd.s32 1, %s137
        $region80: #{_predictor_forward_jit.1} parent=73 // loop_footer_branch
          %136 = sbr.rel target = $region76
        $region81: #{_predictor_forward_jit.1} parent=73 // loop_exit
          _
      $region74: #{_predictor_forward_jit.1} parent=58 // pred_fallthru
        _
    $region59: #{_predictor_forward_jit.1} parent=1 // pred_fallthru
      _
    // Predicated region
    $region60: #{_predictor_forward_jit.1} parent=1 // pred_check
      %p109 = pneg %p105
    $region61: #{_predictor_forward_jit.1} parent=1 // pred_check_branch
      %111 = sbr.rel (%p109) target = $region63
    $region62: #{_predictor_forward_jit.1} parent=1 // pred_region
      %s112 = sshll.u32 1, 4
      %s113 = ssub.s32 %s112, 1
      loop: start=0, step=1, limit=1
      $region64: #{_predictor_forward_jit.1} parent=62 // loop_pre_header
        _
      $region65: #{_predictor_forward_jit.1} parent=62 // loop_header
        %s115 = sphi 0, %s119
        %p116 = scmp.ge.s32.totalorder %s115, 1
        %s120 = sphi %s6, %s6
        %s121 = sphi [#allocation5], [#allocation5]
      $region66: #{_predictor_forward_jit.1} parent=62 // loop_header_branch
        %118 = sbr.rel (%p116) target = $region70
      $region67: #{_predictor_forward_jit.1} parent=62 // loop_body
        %v122 = vld [vmem:[%s120] sm:%s113]
        %123 = vst [vmem:[%s121] sm:%s113] %v122
      $region68: #{_predictor_forward_jit.1} parent=62 // loop_footer
        %s119 = sadd.s32 1, %s115
      $region69: #{_predictor_forward_jit.1} parent=62 // loop_footer_branch
        %114 = sbr.rel target = $region65
      $region70: #{_predictor_forward_jit.1} parent=62 // loop_exit
        _
    $region63: #{_predictor_forward_jit.1} parent=1 // pred_fallthru
      _
    // Predicated region
    $region82: #{_predictor_forward_jit.1} parent=1 // pred_check
      _
    $region83: #{_predictor_forward_jit.1} parent=1 // pred_check_branch
      %148 = sbr.rel (0) target = $region85
    $region84: #{_predictor_forward_jit.1} parent=1 // pred_region
      %149 = vsyncadd %s103, 64
    $region85: #{_predictor_forward_jit.1} parent=1 // pred_fallthru
      _
    %v150 = vld [vmem:[%s0] sm:$0xff]
    %v151 = vld [vmem:[%s0 + $0x8] sm:$0xff]
    %v152 = vld [vmem:[%s0 + $0x10] sm:$0xff]
    %v153 = vld [vmem:[%s0 + $0x18] sm:$0xff]
    %v154 = vpack.c.bf16 %v150, %v150
    %v155 = vpack.c.bf16 %v151, %v151
    %v156 = vpack.c.bf16 %v152, %v152
    %v157 = vpack.c.bf16 %v153, %v153
    %v158 = vld [vmem:[#allocation7] sm:$0xff]
    %v159 = vld [vmem:[#allocation7 + $0x8] sm:$0xff]
    %v160 = vld [vmem:[#allocation7 + $0x10] sm:$0xff]
    %v161 = vld [vmem:[#allocation7 + $0x18] sm:$0xff]
    %v162 = vld [vmem:[#allocation7 + $0x20] sm:$0xff]
    %v163 = vld [vmem:[#allocation7 + $0x28] sm:$0xff]
    %v164 = vld [vmem:[#allocation7 + $0x30] sm:$0xff]
    %v165 = vld [vmem:[#allocation7 + $0x38] sm:$0xff]
    %v166 = vld [vmem:[#allocation7 + $0x40] sm:$0xff]
    %v167 = vld [vmem:[#allocation7 + $0x48] sm:$0xff]
    %v168 = vld [vmem:[#allocation7 + $0x50] sm:$0xff]
    %v169 = vld [vmem:[#allocation7 + $0x58] sm:$0xff]
    %v170 = vld [vmem:[#allocation7 + $0x60] sm:$0xff]
    %v171 = vld [vmem:[#allocation7 + $0x68] sm:$0xff]
    %v172 = vld [vmem:[#allocation7 + $0x70] sm:$0xff]
    %v173 = vld [vmem:[#allocation7 + $0x78] sm:$0xff]
    %v174 = vld [vmem:[#allocation7 + $0x80] sm:$0xff]
    %v175 = vld [vmem:[#allocation7 + $0x88] sm:$0xff]
    %v176 = vld [vmem:[#allocation7 + $0x90] sm:$0xff]
    %v177 = vld [vmem:[#allocation7 + $0x98] sm:$0xff]
    %v178 = vld [vmem:[#allocation7 + $0xa0] sm:$0xff]
    %v179 = vld [vmem:[#allocation7 + $0xa8] sm:$0xff]
    %v180 = vld [vmem:[#allocation7 + $0xb0] sm:$0xff]
    %v181 = vld [vmem:[#allocation7 + $0xb8] sm:$0xff]
    %v182 = vld [vmem:[#allocation7 + $0xc0] sm:$0xff]
    %v183 = vld [vmem:[#allocation7 + $0xc8] sm:$0xff]
    %v184 = vld [vmem:[#allocation7 + $0xd0] sm:$0xff]
    %v185 = vld [vmem:[#allocation7 + $0xd8] sm:$0xff]
    %v186 = vld [vmem:[#allocation7 + $0xe0] sm:$0xff]
    %v187 = vld [vmem:[#allocation7 + $0xe8] sm:$0xff]
    %v188 = vld [vmem:[#allocation7 + $0xf0] sm:$0xff]
    %v189 = vld [vmem:[#allocation7 + $0xf8] sm:$0xff]
    %v190 = vld [vmem:[#allocation7 + $0x100] sm:$0xff]
    %v191 = vld [vmem:[#allocation7 + $0x108] sm:$0xff]
    %v192 = vld [vmem:[#allocation7 + $0x110] sm:$0xff]
    %v193 = vld [vmem:[#allocation7 + $0x118] sm:$0xff]
    %v194 = vld [vmem:[#allocation7 + $0x120] sm:$0xff]
    %v195 = vld [vmem:[#allocation7 + $0x128] sm:$0xff]
    %v196 = vld [vmem:[#allocation7 + $0x130] sm:$0xff]
    %v197 = vld [vmem:[#allocation7 + $0x138] sm:$0xff]
    %v198 = vld [vmem:[#allocation7 + $0x140] sm:$0xff]
    %v199 = vld [vmem:[#allocation7 + $0x148] sm:$0xff]
    %v200 = vld [vmem:[#allocation7 + $0x150] sm:$0xff]
    %v201 = vld [vmem:[#allocation7 + $0x158] sm:$0xff]
    %v202 = vld [vmem:[#allocation7 + $0x160] sm:$0xff]
    %v203 = vld [vmem:[#allocation7 + $0x168] sm:$0xff]
    %v204 = vld [vmem:[#allocation7 + $0x170] sm:$0xff]
    %v205 = vld [vmem:[#allocation7 + $0x178] sm:$0xff]
    %v206 = vld [vmem:[#allocation7 + $0x180] sm:$0xff]
    %v207 = vld [vmem:[#allocation7 + $0x188] sm:$0xff]
    %v208 = vld [vmem:[#allocation7 + $0x190] sm:$0xff]
    %v209 = vld [vmem:[#allocation7 + $0x198] sm:$0xff]
    %v210 = vld [vmem:[#allocation7 + $0x1a0] sm:$0xff]
    %v211 = vld [vmem:[#allocation7 + $0x1a8] sm:$0xff]
    %v212 = vld [vmem:[#allocation7 + $0x1b0] sm:$0xff]
    %v213 = vld [vmem:[#allocation7 + $0x1b8] sm:$0xff]
    %v214 = vld [vmem:[#allocation7 + $0x1c0] sm:$0xff]
    %v215 = vld [vmem:[#allocation7 + $0x1c8] sm:$0xff]
    %v216 = vld [vmem:[#allocation7 + $0x1d0] sm:$0xff]
    %v217 = vld [vmem:[#allocation7 + $0x1d8] sm:$0xff]
    %v218 = vld [vmem:[#allocation7 + $0x1e0] sm:$0xff]
    %v219 = vld [vmem:[#allocation7 + $0x1e8] sm:$0xff]
    %v220 = vld [vmem:[#allocation7 + $0x1f0] sm:$0xff]
    %v221 = vld [vmem:[#allocation7 + $0x1f8] sm:$0xff]
    %v222 = vld [vmem:[#allocation7 + $0x200] sm:$0xff]
    %v223 = vld [vmem:[#allocation7 + $0x208] sm:$0xff]
    %v224 = vld [vmem:[#allocation7 + $0x210] sm:$0xff]
    %v225 = vld [vmem:[#allocation7 + $0x218] sm:$0xff]
    %v226 = vld [vmem:[#allocation7 + $0x220] sm:$0xff]
    %v227 = vld [vmem:[#allocation7 + $0x228] sm:$0xff]
    %v228 = vld [vmem:[#allocation7 + $0x230] sm:$0xff]
    %v229 = vld [vmem:[#allocation7 + $0x238] sm:$0xff]
    %v230 = vld [vmem:[#allocation7 + $0x240] sm:$0xff]
    %v231 = vld [vmem:[#allocation7 + $0x248] sm:$0xff]
    %v232 = vld [vmem:[#allocation7 + $0x250] sm:$0xff]
    %v233 = vld [vmem:[#allocation7 + $0x258] sm:$0xff]
    %v234 = vld [vmem:[#allocation7 + $0x260] sm:$0xff]
    %v235 = vld [vmem:[#allocation7 + $0x268] sm:$0xff]
    %v236 = vld [vmem:[#allocation7 + $0x270] sm:$0xff]
    %v237 = vld [vmem:[#allocation7 + $0x278] sm:$0xff]
    %v238 = vld [vmem:[#allocation7 + $0x280] sm:$0xff]
    %v239 = vld [vmem:[#allocation7 + $0x288] sm:$0xff]
    %v240 = vld [vmem:[#allocation7 + $0x290] sm:$0xff]
    %v241 = vld [vmem:[#allocation7 + $0x298] sm:$0xff]
    %v242 = vld [vmem:[#allocation7 + $0x2a0] sm:$0xff]
    %v243 = vld [vmem:[#allocation7 + $0x2a8] sm:$0xff]
    %v244 = vld [vmem:[#allocation7 + $0x2b0] sm:$0xff]
    %v245 = vld [vmem:[#allocation7 + $0x2b8] sm:$0xff]
    %v246 = vld [vmem:[#allocation7 + $0x2c0] sm:$0xff]
    %v247 = vld [vmem:[#allocation7 + $0x2c8] sm:$0xff]
    %v248 = vld [vmem:[#allocation7 + $0x2d0] sm:$0xff]
    %v249 = vld [vmem:[#allocation7 + $0x2d8] sm:$0xff]
    %v250 = vld [vmem:[#allocation7 + $0x2e0] sm:$0xff]
    %v251 = vld [vmem:[#allocation7 + $0x2e8] sm:$0xff]
    %v252 = vld [vmem:[#allocation7 + $0x2f0] sm:$0xff]
    %v253 = vld [vmem:[#allocation7 + $0x2f8] sm:$0xff]
    %v254 = vld [vmem:[#allocation7 + $0x300] sm:$0xff]
    %v255 = vld [vmem:[#allocation7 + $0x308] sm:$0xff]
    %v256 = vld [vmem:[#allocation7 + $0x310] sm:$0xff]
    %v257 = vld [vmem:[#allocation7 + $0x318] sm:$0xff]
    %v258 = vld [vmem:[#allocation7 + $0x320] sm:$0xff]
    %v259 = vld [vmem:[#allocation7 + $0x328] sm:$0xff]
    %v260 = vld [vmem:[#allocation7 + $0x330] sm:$0xff]
    %v261 = vld [vmem:[#allocation7 + $0x338] sm:$0xff]
    %v262 = vld [vmem:[#allocation7 + $0x340] sm:$0xff]
    %v263 = vld [vmem:[#allocation7 + $0x348] sm:$0xff]
    %v264 = vld [vmem:[#allocation7 + $0x350] sm:$0xff]
    %v265 = vld [vmem:[#allocation7 + $0x358] sm:$0xff]
    %v266 = vld [vmem:[#allocation7 + $0x360] sm:$0xff]
    %v267 = vld [vmem:[#allocation7 + $0x368] sm:$0xff]
    %v268 = vld [vmem:[#allocation7 + $0x370] sm:$0xff]
    %v269 = vld [vmem:[#allocation7 + $0x378] sm:$0xff]
    %v270 = vld [vmem:[#allocation7 + $0x380] sm:$0xff]
    %v271 = vld [vmem:[#allocation7 + $0x388] sm:$0xff]
    %v272 = vld [vmem:[#allocation7 + $0x390] sm:$0xff]
    %v273 = vld [vmem:[#allocation7 + $0x398] sm:$0xff]
    %v274 = vld [vmem:[#allocation7 + $0x3a0] sm:$0xff]
    %v275 = vld [vmem:[#allocation7 + $0x3a8] sm:$0xff]
    %v276 = vld [vmem:[#allocation7 + $0x3b0] sm:$0xff]
    %v277 = vld [vmem:[#allocation7 + $0x3b8] sm:$0xff]
    %v278 = vld [vmem:[#allocation7 + $0x3c0] sm:$0xff]
    %v279 = vld [vmem:[#allocation7 + $0x3c8] sm:$0xff]
    %v280 = vld [vmem:[#allocation7 + $0x3d0] sm:$0xff]
    %v281 = vld [vmem:[#allocation7 + $0x3d8] sm:$0xff]
    %v282 = vld [vmem:[#allocation7 + $0x3e0] sm:$0xff]
    %v283 = vld [vmem:[#allocation7 + $0x3e8] sm:$0xff]
    %v284 = vld [vmem:[#allocation7 + $0x3f0] sm:$0xff]
    %v285 = vld [vmem:[#allocation7 + $0x3f8] sm:$0xff]
    %v286 = vld [vmem:[%s2] sm:$0xf]
    %v288 = vlaneseq
    %v289 = vshrl.u32 %v288, 7
    %v290 = vsub.s32 0, %v289
    %v291 = vrot.slane %v286, %v290
    %v292 = vlaneseq
    %v293 = vshrl.u32 %v292, 7
    %v294 = vsub.s32 1, %v293
    %v295 = vrot.slane %v286, %v294
    %v296 = vlaneseq
    %v297 = vshrl.u32 %v296, 7
    %v298 = vsub.s32 2, %v297
    %v299 = vrot.slane %v286, %v298
    %v300 = vlaneseq
    %v301 = vshrl.u32 %v300, 7
    %v302 = vsub.s32 3, %v301
    %v303 = vrot.slane %v286, %v302
    %v436 = vunpack.c.l.b16 %v158
    %v437 = vunpack.c.h.b16 %v158
    %v438 = vunpack.c.l.b16 %v159
    %v439 = vunpack.c.h.b16 %v159
    %v440 = vunpack.c.l.b16 %v160
    %v441 = vunpack.c.h.b16 %v160
    %v442 = vunpack.c.l.b16 %v161
    %v443 = vunpack.c.h.b16 %v161
    %v444 = vunpack.c.l.b16 %v162
    %v445 = vunpack.c.h.b16 %v162
    %v446 = vunpack.c.l.b16 %v163
    %v447 = vunpack.c.h.b16 %v163
    %v448 = vunpack.c.l.b16 %v164
    %v449 = vunpack.c.h.b16 %v164
    %v450 = vunpack.c.l.b16 %v165
    %v451 = vunpack.c.h.b16 %v165
    %v452 = vunpack.c.l.b16 %v166
    %v453 = vunpack.c.h.b16 %v166
    %v454 = vunpack.c.l.b16 %v167
    %v455 = vunpack.c.h.b16 %v167
    %v456 = vunpack.c.l.b16 %v168
    %v457 = vunpack.c.h.b16 %v168
    %v458 = vunpack.c.l.b16 %v169
    %v459 = vunpack.c.h.b16 %v169
    %v460 = vunpack.c.l.b16 %v170
    %v461 = vunpack.c.h.b16 %v170
    %v462 = vunpack.c.l.b16 %v171
    %v463 = vunpack.c.h.b16 %v171
    %v464 = vunpack.c.l.b16 %v172
    %v465 = vunpack.c.h.b16 %v172
    %v466 = vunpack.c.l.b16 %v173
    %v467 = vunpack.c.h.b16 %v173
    %v468 = vunpack.c.l.b16 %v174
    %v469 = vunpack.c.h.b16 %v174
    %v470 = vunpack.c.l.b16 %v175
    %v471 = vunpack.c.h.b16 %v175
    %v472 = vunpack.c.l.b16 %v176
    %v473 = vunpack.c.h.b16 %v176
    %v474 = vunpack.c.l.b16 %v177
    %v475 = vunpack.c.h.b16 %v177
    %v476 = vunpack.c.l.b16 %v178
    %v477 = vunpack.c.h.b16 %v178
    %v478 = vunpack.c.l.b16 %v179
    %v479 = vunpack.c.h.b16 %v179
    %v480 = vunpack.c.l.b16 %v180
    %v481 = vunpack.c.h.b16 %v180
    %v482 = vunpack.c.l.b16 %v181
    %v483 = vunpack.c.h.b16 %v181
    %v484 = vunpack.c.l.b16 %v182
    %v485 = vunpack.c.h.b16 %v182
    %v486 = vunpack.c.l.b16 %v183
    %v487 = vunpack.c.h.b16 %v183
    %v488 = vunpack.c.l.b16 %v184
    %v489 = vunpack.c.h.b16 %v184
    %v490 = vunpack.c.l.b16 %v185
    %v491 = vunpack.c.h.b16 %v185
    %v492 = vunpack.c.l.b16 %v186
    %v493 = vunpack.c.h.b16 %v186
    %v494 = vunpack.c.l.b16 %v187
    %v495 = vunpack.c.h.b16 %v187
    %v496 = vunpack.c.l.b16 %v188
    %v497 = vunpack.c.h.b16 %v188
    %v498 = vunpack.c.l.b16 %v189
    %v499 = vunpack.c.h.b16 %v189
    %v500 = vunpack.c.l.b16 %v190
    %v501 = vunpack.c.h.b16 %v190
    %v502 = vunpack.c.l.b16 %v191
    %v503 = vunpack.c.h.b16 %v191
    %v504 = vunpack.c.l.b16 %v192
    %v505 = vunpack.c.h.b16 %v192
    %v506 = vunpack.c.l.b16 %v193
    %v507 = vunpack.c.h.b16 %v193
    %v508 = vunpack.c.l.b16 %v194
    %v509 = vunpack.c.h.b16 %v194
    %v510 = vunpack.c.l.b16 %v195
    %v511 = vunpack.c.h.b16 %v195
    %v512 = vunpack.c.l.b16 %v196
    %v513 = vunpack.c.h.b16 %v196
    %v514 = vunpack.c.l.b16 %v197
    %v515 = vunpack.c.h.b16 %v197
    %v516 = vunpack.c.l.b16 %v198
    %v517 = vunpack.c.h.b16 %v198
    %v518 = vunpack.c.l.b16 %v199
    %v519 = vunpack.c.h.b16 %v199
    %v520 = vunpack.c.l.b16 %v200
    %v521 = vunpack.c.h.b16 %v200
    %v522 = vunpack.c.l.b16 %v201
    %v523 = vunpack.c.h.b16 %v201
    %v524 = vunpack.c.l.b16 %v202
    %v525 = vunpack.c.h.b16 %v202
    %v526 = vunpack.c.l.b16 %v203
    %v527 = vunpack.c.h.b16 %v203
    %v528 = vunpack.c.l.b16 %v204
    %v529 = vunpack.c.h.b16 %v204
    %v530 = vunpack.c.l.b16 %v205
    %v531 = vunpack.c.h.b16 %v205
    %v532 = vunpack.c.l.b16 %v206
    %v533 = vunpack.c.h.b16 %v206
    %v534 = vunpack.c.l.b16 %v207
    %v535 = vunpack.c.h.b16 %v207
    %v536 = vunpack.c.l.b16 %v208
    %v537 = vunpack.c.h.b16 %v208
    %v538 = vunpack.c.l.b16 %v209
    %v539 = vunpack.c.h.b16 %v209
    %v540 = vunpack.c.l.b16 %v210
    %v541 = vunpack.c.h.b16 %v210
    %v542 = vunpack.c.l.b16 %v211
    %v543 = vunpack.c.h.b16 %v211
    %v544 = vunpack.c.l.b16 %v212
    %v545 = vunpack.c.h.b16 %v212
    %v546 = vunpack.c.l.b16 %v213
    %v547 = vunpack.c.h.b16 %v213
    %v548 = vunpack.c.l.b16 %v214
    %v549 = vunpack.c.h.b16 %v214
    %v550 = vunpack.c.l.b16 %v215
    %v551 = vunpack.c.h.b16 %v215
    %v552 = vunpack.c.l.b16 %v216
    %v553 = vunpack.c.h.b16 %v216
    %v554 = vunpack.c.l.b16 %v217
    %v555 = vunpack.c.h.b16 %v217
    %v556 = vunpack.c.l.b16 %v218
    %v557 = vunpack.c.h.b16 %v218
    %v558 = vunpack.c.l.b16 %v219
    %v559 = vunpack.c.h.b16 %v219
    %v560 = vunpack.c.l.b16 %v220
    %v561 = vunpack.c.h.b16 %v220
    %v562 = vunpack.c.l.b16 %v221
    %v563 = vunpack.c.h.b16 %v221
    %v564 = vunpack.c.l.b16 %v222
    %v565 = vunpack.c.h.b16 %v222
    %v566 = vunpack.c.l.b16 %v223
    %v567 = vunpack.c.h.b16 %v223
    %v568 = vunpack.c.l.b16 %v224
    %v569 = vunpack.c.h.b16 %v224
    %v570 = vunpack.c.l.b16 %v225
    %v571 = vunpack.c.h.b16 %v225
    %v572 = vunpack.c.l.b16 %v226
    %v573 = vunpack.c.h.b16 %v226
    %v574 = vunpack.c.l.b16 %v227
    %v575 = vunpack.c.h.b16 %v227
    %v576 = vunpack.c.l.b16 %v228
    %v577 = vunpack.c.h.b16 %v228
    %v578 = vunpack.c.l.b16 %v229
    %v579 = vunpack.c.h.b16 %v229
    %v580 = vunpack.c.l.b16 %v230
    %v581 = vunpack.c.h.b16 %v230
    %v582 = vunpack.c.l.b16 %v231
    %v583 = vunpack.c.h.b16 %v231
    %v584 = vunpack.c.l.b16 %v232
    %v585 = vunpack.c.h.b16 %v232
    %v586 = vunpack.c.l.b16 %v233
    %v587 = vunpack.c.h.b16 %v233
    %v588 = vunpack.c.l.b16 %v234
    %v589 = vunpack.c.h.b16 %v234
    %v590 = vunpack.c.l.b16 %v235
    %v591 = vunpack.c.h.b16 %v235
    %v592 = vunpack.c.l.b16 %v236
    %v593 = vunpack.c.h.b16 %v236
    %v594 = vunpack.c.l.b16 %v237
    %v595 = vunpack.c.h.b16 %v237
    %v596 = vunpack.c.l.b16 %v238
    %v597 = vunpack.c.h.b16 %v238
    %v598 = vunpack.c.l.b16 %v239
    %v599 = vunpack.c.h.b16 %v239
    %v600 = vunpack.c.l.b16 %v240
    %v601 = vunpack.c.h.b16 %v240
    %v602 = vunpack.c.l.b16 %v241
    %v603 = vunpack.c.h.b16 %v241
    %v604 = vunpack.c.l.b16 %v242
    %v605 = vunpack.c.h.b16 %v242
    %v606 = vunpack.c.l.b16 %v243
    %v607 = vunpack.c.h.b16 %v243
    %v608 = vunpack.c.l.b16 %v244
    %v609 = vunpack.c.h.b16 %v244
    %v610 = vunpack.c.l.b16 %v245
    %v611 = vunpack.c.h.b16 %v245
    %v612 = vunpack.c.l.b16 %v246
    %v613 = vunpack.c.h.b16 %v246
    %v614 = vunpack.c.l.b16 %v247
    %v615 = vunpack.c.h.b16 %v247
    %v616 = vunpack.c.l.b16 %v248
    %v617 = vunpack.c.h.b16 %v248
    %v618 = vunpack.c.l.b16 %v249
    %v619 = vunpack.c.h.b16 %v249
    %v620 = vunpack.c.l.b16 %v250
    %v621 = vunpack.c.h.b16 %v250
    %v622 = vunpack.c.l.b16 %v251
    %v623 = vunpack.c.h.b16 %v251
    %v624 = vunpack.c.l.b16 %v252
    %v625 = vunpack.c.h.b16 %v252
    %v626 = vunpack.c.l.b16 %v253
    %v627 = vunpack.c.h.b16 %v253
    %v628 = vunpack.c.l.b16 %v254
    %v629 = vunpack.c.h.b16 %v254
    %v630 = vunpack.c.l.b16 %v255
    %v631 = vunpack.c.h.b16 %v255
    %v632 = vunpack.c.l.b16 %v256
    %v633 = vunpack.c.h.b16 %v256
    %v634 = vunpack.c.l.b16 %v257
    %v635 = vunpack.c.h.b16 %v257
    %v636 = vunpack.c.l.b16 %v258
    %v637 = vunpack.c.h.b16 %v258
    %v638 = vunpack.c.l.b16 %v259
    %v639 = vunpack.c.h.b16 %v259
    %v640 = vunpack.c.l.b16 %v260
    %v641 = vunpack.c.h.b16 %v260
    %v642 = vunpack.c.l.b16 %v261
    %v643 = vunpack.c.h.b16 %v261
    %v644 = vunpack.c.l.b16 %v262
    %v645 = vunpack.c.h.b16 %v262
    %v646 = vunpack.c.l.b16 %v263
    %v647 = vunpack.c.h.b16 %v263
    %v648 = vunpack.c.l.b16 %v264
    %v649 = vunpack.c.h.b16 %v264
    %v650 = vunpack.c.l.b16 %v265
    %v651 = vunpack.c.h.b16 %v265
    %v652 = vunpack.c.l.b16 %v266
    %v653 = vunpack.c.h.b16 %v266
    %v654 = vunpack.c.l.b16 %v267
    %v655 = vunpack.c.h.b16 %v267
    %v656 = vunpack.c.l.b16 %v268
    %v657 = vunpack.c.h.b16 %v268
    %v658 = vunpack.c.l.b16 %v269
    %v659 = vunpack.c.h.b16 %v269
    %v660 = vunpack.c.l.b16 %v270
    %v661 = vunpack.c.h.b16 %v270
    %v662 = vunpack.c.l.b16 %v271
    %v663 = vunpack.c.h.b16 %v271
    %v664 = vunpack.c.l.b16 %v272
    %v665 = vunpack.c.h.b16 %v272
    %v666 = vunpack.c.l.b16 %v273
    %v667 = vunpack.c.h.b16 %v273
    %v668 = vunpack.c.l.b16 %v274
    %v669 = vunpack.c.h.b16 %v274
    %v670 = vunpack.c.l.b16 %v275
    %v671 = vunpack.c.h.b16 %v275
    %v672 = vunpack.c.l.b16 %v276
    %v673 = vunpack.c.h.b16 %v276
    %v674 = vunpack.c.l.b16 %v277
    %v675 = vunpack.c.h.b16 %v277
    %v676 = vunpack.c.l.b16 %v278
    %v677 = vunpack.c.h.b16 %v278
    %v678 = vunpack.c.l.b16 %v279
    %v679 = vunpack.c.h.b16 %v279
    %v680 = vunpack.c.l.b16 %v280
    %v681 = vunpack.c.h.b16 %v280
    %v682 = vunpack.c.l.b16 %v281
    %v683 = vunpack.c.h.b16 %v281
    %v684 = vunpack.c.l.b16 %v282
    %v685 = vunpack.c.h.b16 %v282
    %v686 = vunpack.c.l.b16 %v283
    %v687 = vunpack.c.h.b16 %v283
    %v688 = vunpack.c.l.b16 %v284
    %v689 = vunpack.c.h.b16 %v284
    %v690 = vunpack.c.l.b16 %v285
    %v691 = vunpack.c.h.b16 %v285
    %v692 = vpack.c.b16 %v440, %v436
    %v693 = vpack.c.b16 %v441, %v437
    %v694 = vpack.c.b16 %v442, %v438
    %v695 = vpack.c.b16 %v443, %v439
    %v696 = vpack.c.b16 %v448, %v444
    %v697 = vpack.c.b16 %v449, %v445
    %v698 = vpack.c.b16 %v450, %v446
    %v699 = vpack.c.b16 %v451, %v447
    %v700 = vpack.c.b16 %v456, %v452
    %v701 = vpack.c.b16 %v457, %v453
    %v702 = vpack.c.b16 %v458, %v454
    %v703 = vpack.c.b16 %v459, %v455
    %v704 = vpack.c.b16 %v464, %v460
    %v705 = vpack.c.b16 %v465, %v461
    %v706 = vpack.c.b16 %v466, %v462
    %v707 = vpack.c.b16 %v467, %v463
    %v708 = vpack.c.b16 %v472, %v468
    %v709 = vpack.c.b16 %v473, %v469
    %v710 = vpack.c.b16 %v474, %v470
    %v711 = vpack.c.b16 %v475, %v471
    %v712 = vpack.c.b16 %v480, %v476
    %v713 = vpack.c.b16 %v481, %v477
    %v714 = vpack.c.b16 %v482, %v478
    %v715 = vpack.c.b16 %v483, %v479
    %v716 = vpack.c.b16 %v488, %v484
    %v717 = vpack.c.b16 %v489, %v485
    %v718 = vpack.c.b16 %v490, %v486
    %v719 = vpack.c.b16 %v491, %v487
    %v720 = vpack.c.b16 %v496, %v492
    %v721 = vpack.c.b16 %v497, %v493
    %v722 = vpack.c.b16 %v498, %v494
    %v723 = vpack.c.b16 %v499, %v495
    %v724 = vpack.c.b16 %v504, %v500
    %v725 = vpack.c.b16 %v505, %v501
    %v726 = vpack.c.b16 %v506, %v502
    %v727 = vpack.c.b16 %v507, %v503
    %v728 = vpack.c.b16 %v512, %v508
    %v729 = vpack.c.b16 %v513, %v509
    %v730 = vpack.c.b16 %v514, %v510
    %v731 = vpack.c.b16 %v515, %v511
    %v732 = vpack.c.b16 %v520, %v516
    %v733 = vpack.c.b16 %v521, %v517
    %v734 = vpack.c.b16 %v522, %v518
    %v735 = vpack.c.b16 %v523, %v519
    %v736 = vpack.c.b16 %v528, %v524
    %v737 = vpack.c.b16 %v529, %v525
    %v738 = vpack.c.b16 %v530, %v526
    %v739 = vpack.c.b16 %v531, %v527
    %v740 = vpack.c.b16 %v536, %v532
    %v741 = vpack.c.b16 %v537, %v533
    %v742 = vpack.c.b16 %v538, %v534
    %v743 = vpack.c.b16 %v539, %v535
    %v744 = vpack.c.b16 %v544, %v540
    %v745 = vpack.c.b16 %v545, %v541
    %v746 = vpack.c.b16 %v546, %v542
    %v747 = vpack.c.b16 %v547, %v543
    %v748 = vpack.c.b16 %v552, %v548
    %v749 = vpack.c.b16 %v553, %v549
    %v750 = vpack.c.b16 %v554, %v550
    %v751 = vpack.c.b16 %v555, %v551
    %v752 = vpack.c.b16 %v560, %v556
    %v753 = vpack.c.b16 %v561, %v557
    %v754 = vpack.c.b16 %v562, %v558
    %v755 = vpack.c.b16 %v563, %v559
    %v756 = vpack.c.b16 %v568, %v564
    %v757 = vpack.c.b16 %v569, %v565
    %v758 = vpack.c.b16 %v570, %v566
    %v759 = vpack.c.b16 %v571, %v567
    %v760 = vpack.c.b16 %v576, %v572
    %v761 = vpack.c.b16 %v577, %v573
    %v762 = vpack.c.b16 %v578, %v574
    %v763 = vpack.c.b16 %v579, %v575
    %v764 = vpack.c.b16 %v584, %v580
    %v765 = vpack.c.b16 %v585, %v581
    %v766 = vpack.c.b16 %v586, %v582
    %v767 = vpack.c.b16 %v587, %v583
    %v768 = vpack.c.b16 %v592, %v588
    %v769 = vpack.c.b16 %v593, %v589
    %v770 = vpack.c.b16 %v594, %v590
    %v771 = vpack.c.b16 %v595, %v591
    %v772 = vpack.c.b16 %v600, %v596
    %v773 = vpack.c.b16 %v601, %v597
    %v774 = vpack.c.b16 %v602, %v598
    %v775 = vpack.c.b16 %v603, %v599
    %v776 = vpack.c.b16 %v608, %v604
    %v777 = vpack.c.b16 %v609, %v605
    %v778 = vpack.c.b16 %v610, %v606
    %v779 = vpack.c.b16 %v611, %v607
    %v780 = vpack.c.b16 %v616, %v612
    %v781 = vpack.c.b16 %v617, %v613
    %v782 = vpack.c.b16 %v618, %v614
    %v783 = vpack.c.b16 %v619, %v615
    %v784 = vpack.c.b16 %v624, %v620
    %v785 = vpack.c.b16 %v625, %v621
    %v786 = vpack.c.b16 %v626, %v622
    %v787 = vpack.c.b16 %v627, %v623
    %v788 = vpack.c.b16 %v632, %v628
    %v789 = vpack.c.b16 %v633, %v629
    %v790 = vpack.c.b16 %v634, %v630
    %v791 = vpack.c.b16 %v635, %v631
    %v792 = vpack.c.b16 %v640, %v636
    %v793 = vpack.c.b16 %v641, %v637
    %v794 = vpack.c.b16 %v642, %v638
    %v795 = vpack.c.b16 %v643, %v639
    %v796 = vpack.c.b16 %v648, %v644
    %v797 = vpack.c.b16 %v649, %v645
    %v798 = vpack.c.b16 %v650, %v646
    %v799 = vpack.c.b16 %v651, %v647
    %v800 = vpack.c.b16 %v656, %v652
    %v801 = vpack.c.b16 %v657, %v653
    %v802 = vpack.c.b16 %v658, %v654
    %v803 = vpack.c.b16 %v659, %v655
    %v804 = vpack.c.b16 %v664, %v660
    %v805 = vpack.c.b16 %v665, %v661
    %v806 = vpack.c.b16 %v666, %v662
    %v807 = vpack.c.b16 %v667, %v663
    %v808 = vpack.c.b16 %v672, %v668
    %v809 = vpack.c.b16 %v673, %v669
    %v810 = vpack.c.b16 %v674, %v670
    %v811 = vpack.c.b16 %v675, %v671
    %v812 = vpack.c.b16 %v680, %v676
    %v813 = vpack.c.b16 %v681, %v677
    %v814 = vpack.c.b16 %v682, %v678
    %v815 = vpack.c.b16 %v683, %v679
    %v816 = vpack.c.b16 %v688, %v684
    %v817 = vpack.c.b16 %v689, %v685
    %v818 = vpack.c.b16 %v690, %v686
    %v819 = vpack.c.b16 %v691, %v687
    %948 = vmatprep.subr.bf16.mxu0 %v721
    %949 = vmatpush1.bf16.msra.mxu0 %v720
    %950 = vmatprep.subr.bf16.mxu0 %v717
    %951 = vmatpush1.bf16.msra.mxu0 %v716
    %952 = vmatprep.subr.bf16.mxu0 %v713
    %953 = vmatpush1.bf16.msra.mxu0 %v712
    %954 = vmatprep.subr.bf16.mxu0 %v709
    %955 = vmatpush1.bf16.msra.mxu0 %v708
    %956 = vmatprep.subr.bf16.mxu0 %v705
    %957 = vmatpush1.bf16.msra.mxu0 %v704
    %958 = vmatprep.subr.bf16.mxu0 %v701
    %959 = vmatpush1.bf16.msra.mxu0 %v700
    %960 = vmatprep.subr.bf16.mxu0 %v697
    %961 = vmatpush1.bf16.msra.mxu0 %v696
    %962 = vmatprep.subr.bf16.mxu0 %v693
    %963 = vmatpush1.bf16.msra.mxu0 %v692
    %964 = vmatprep.subr.bf16.mxu0 %v753
    %965 = vmatpush2.bf16.msra.mxu0 %v752
    %966 = vmatprep.subr.bf16.mxu0 %v749
    %967 = vmatpush2.bf16.msra.mxu0 %v748
    %968 = vmatprep.subr.bf16.mxu0 %v745
    %969 = vmatpush2.bf16.msra.mxu0 %v744
    %970 = vmatprep.subr.bf16.mxu0 %v741
    %971 = vmatpush2.bf16.msra.mxu0 %v740
    %972 = vmatprep.subr.bf16.mxu0 %v737
    %973 = vmatpush2.bf16.msra.mxu0 %v736
    %974 = vmatprep.subr.bf16.mxu0 %v733
    %975 = vmatpush2.bf16.msra.mxu0 %v732
    %976 = vmatprep.subr.bf16.mxu0 %v729
    %977 = vmatpush2.bf16.msra.mxu0 %v728
    %978 = vmatprep.subr.bf16.mxu0 %v725
    %979 = vmatpush2.bf16.msra.mxu0 %v724
    %980 = vmatprep.mubr.bf16.mxu0 %v155
    %981 = vmatmul.mubr.bf16.gmra.mxu0 %v154
    %v982 = vpop.f32.mrf.mxu0
    %v983 = vadd.f32 %v291, %v982
    %v984 = vpop.f32.mrf.mxu0
    %v985 = vadd.f32 %v295, %v984
    %v986 = vpop.f32.mrf.mxu0
    %v987 = vpop.f32.mrf.mxu0
    %988 = vdwg.mxu0
    %989 = vmatprep.subr.bf16.mxu0 %v785
    %990 = vmatpush1.bf16.msra.mxu0 %v784
    %991 = vmatprep.subr.bf16.mxu0 %v781
    %992 = vmatpush1.bf16.msra.mxu0 %v780
    %993 = vmatprep.subr.bf16.mxu0 %v777
    %994 = vmatpush1.bf16.msra.mxu0 %v776
    %995 = vmatprep.subr.bf16.mxu0 %v773
    %996 = vmatpush1.bf16.msra.mxu0 %v772
    %997 = vmatprep.subr.bf16.mxu0 %v769
    %998 = vmatpush1.bf16.msra.mxu0 %v768
    %999 = vmatprep.subr.bf16.mxu0 %v765
    %1000 = vmatpush1.bf16.msra.mxu0 %v764
    %1001 = vmatprep.subr.bf16.mxu0 %v761
    %1002 = vmatpush1.bf16.msra.mxu0 %v760
    %1003 = vmatprep.subr.bf16.mxu0 %v757
    %1004 = vmatpush1.bf16.msra.mxu0 %v756
    %1005 = vmatprep.subr.bf16.mxu0 %v817
    %1006 = vmatpush2.bf16.msra.mxu0 %v816
    %1007 = vmatprep.subr.bf16.mxu0 %v813
    %1008 = vmatpush2.bf16.msra.mxu0 %v812
    %1009 = vmatprep.subr.bf16.mxu0 %v809
    %1010 = vmatpush2.bf16.msra.mxu0 %v808
    %1011 = vmatprep.subr.bf16.mxu0 %v805
    %1012 = vmatpush2.bf16.msra.mxu0 %v804
    %1013 = vmatprep.subr.bf16.mxu0 %v801
    %1014 = vmatpush2.bf16.msra.mxu0 %v800
    %1015 = vmatprep.subr.bf16.mxu0 %v797
    %1016 = vmatpush2.bf16.msra.mxu0 %v796
    %1017 = vmatprep.subr.bf16.mxu0 %v793
    %1018 = vmatpush2.bf16.msra.mxu0 %v792
    %1019 = vmatprep.subr.bf16.mxu0 %v789
    %1020 = vmatpush2.bf16.msra.mxu0 %v788
    %1021 = vmatprep.mubr.bf16.mxu0 %v157
    %1022 = vmatmul.mubr.bf16.gmra.mxu0 %v156
    %v1023 = vpop.f32.mrf.mxu0
    %v1024 = vadd.f32 %v983, %v1023
    %v1025 = vpop.f32.mrf.mxu0
    %v1026 = vadd.f32 %v985, %v1025
    %v1027 = vpop.f32.mrf.mxu0
    %v1028 = vpop.f32.mrf.mxu0
    %1029 = vdwg.mxu0
    %1030 = vmatprep.subr.bf16.mxu0 %v723
    %1031 = vmatpush1.bf16.msra.mxu0 %v722
    %1032 = vmatprep.subr.bf16.mxu0 %v719
    %1033 = vmatpush1.bf16.msra.mxu0 %v718
    %1034 = vmatprep.subr.bf16.mxu0 %v715
    %1035 = vmatpush1.bf16.msra.mxu0 %v714
    %1036 = vmatprep.subr.bf16.mxu0 %v711
    %1037 = vmatpush1.bf16.msra.mxu0 %v710
    %1038 = vmatprep.subr.bf16.mxu0 %v707
    %1039 = vmatpush1.bf16.msra.mxu0 %v706
    %1040 = vmatprep.subr.bf16.mxu0 %v703
    %1041 = vmatpush1.bf16.msra.mxu0 %v702
    %1042 = vmatprep.subr.bf16.mxu0 %v699
    %1043 = vmatpush1.bf16.msra.mxu0 %v698
    %1044 = vmatprep.subr.bf16.mxu0 %v695
    %1045 = vmatpush1.bf16.msra.mxu0 %v694
    %1046 = vmatprep.subr.bf16.mxu0 %v755
    %1047 = vmatpush2.bf16.msra.mxu0 %v754
    %1048 = vmatprep.subr.bf16.mxu0 %v751
    %1049 = vmatpush2.bf16.msra.mxu0 %v750
    %1050 = vmatprep.subr.bf16.mxu0 %v747
    %1051 = vmatpush2.bf16.msra.mxu0 %v746
    %1052 = vmatprep.subr.bf16.mxu0 %v743
    %1053 = vmatpush2.bf16.msra.mxu0 %v742
    %1054 = vmatprep.subr.bf16.mxu0 %v739
    %1055 = vmatpush2.bf16.msra.mxu0 %v738
    %1056 = vmatprep.subr.bf16.mxu0 %v735
    %1057 = vmatpush2.bf16.msra.mxu0 %v734
    %1058 = vmatprep.subr.bf16.mxu0 %v731
    %1059 = vmatpush2.bf16.msra.mxu0 %v730
    %1060 = vmatprep.subr.bf16.mxu0 %v727
    %1061 = vmatpush2.bf16.msra.mxu0 %v726
    %1062 = vmatprep.mubr.bf16.mxu0 %v155
    %1063 = vmatmul.mubr.bf16.gmra.mxu0 %v154
    %v1064 = vpop.f32.mrf.mxu0
    %v1065 = vadd.f32 %v299, %v1064
    %v1066 = vpop.f32.mrf.mxu0
    %v1067 = vadd.f32 %v303, %v1066
    %v1068 = vpop.f32.mrf.mxu0
    %v1069 = vpop.f32.mrf.mxu0
    %1070 = vdwg.mxu0
    %1071 = vmatprep.subr.bf16.mxu0 %v787
    %1072 = vmatpush1.bf16.msra.mxu0 %v786
    %1073 = vmatprep.subr.bf16.mxu0 %v783
    %1074 = vmatpush1.bf16.msra.mxu0 %v782
    %1075 = vmatprep.subr.bf16.mxu0 %v779
    %1076 = vmatpush1.bf16.msra.mxu0 %v778
    %1077 = vmatprep.subr.bf16.mxu0 %v775
    %1078 = vmatpush1.bf16.msra.mxu0 %v774
    %1079 = vmatprep.subr.bf16.mxu0 %v771
    %1080 = vmatpush1.bf16.msra.mxu0 %v770
    %1081 = vmatprep.subr.bf16.mxu0 %v767
    %1082 = vmatpush1.bf16.msra.mxu0 %v766
    %1083 = vmatprep.subr.bf16.mxu0 %v763
    %1084 = vmatpush1.bf16.msra.mxu0 %v762
    %1085 = vmatprep.subr.bf16.mxu0 %v759
    %1086 = vmatpush1.bf16.msra.mxu0 %v758
    %1087 = vmatprep.subr.bf16.mxu0 %v819
    %1088 = vmatpush2.bf16.msra.mxu0 %v818
    %1089 = vmatprep.subr.bf16.mxu0 %v815
    %1090 = vmatpush2.bf16.msra.mxu0 %v814
    %1091 = vmatprep.subr.bf16.mxu0 %v811
    %1092 = vmatpush2.bf16.msra.mxu0 %v810
    %1093 = vmatprep.subr.bf16.mxu0 %v807
    %1094 = vmatpush2.bf16.msra.mxu0 %v806
    %1095 = vmatprep.subr.bf16.mxu0 %v803
    %1096 = vmatpush2.bf16.msra.mxu0 %v802
    %1097 = vmatprep.subr.bf16.mxu0 %v799
    %1098 = vmatpush2.bf16.msra.mxu0 %v798
    %1099 = vmatprep.subr.bf16.mxu0 %v795
    %1100 = vmatpush2.bf16.msra.mxu0 %v794
    %1101 = vmatprep.subr.bf16.mxu0 %v791
    %1102 = vmatpush2.bf16.msra.mxu0 %v790
    %1103 = vmatprep.mubr.bf16.mxu0 %v157
    %1104 = vmatmul.mubr.bf16.gmra.mxu0 %v156
    %v1105 = vpop.f32.mrf.mxu0
    %v1106 = vadd.f32 %v1065, %v1105
    %v1107 = vpop.f32.mrf.mxu0
    %v1108 = vadd.f32 %v1067, %v1107
    %v1109 = vpop.f32.mrf.mxu0
    %v1110 = vpop.f32.mrf.mxu0
    %1111 = vdwg.mxu0
    %v1112 = vmax.f32 %v1024, 0.0
    %v1113 = vmax.f32 %v1026, 0.0
    %v1114 = vmax.f32 %v1106, 0.0
    %v1115 = vmax.f32 %v1108, 0.0
    %v1116 = vpack.c.bf16 %v1112, %v1112
    %v1117 = vpack.c.bf16 %v1113, %v1113
    %v1118 = vpack.c.bf16 %v1114, %v1114
    %v1119 = vpack.c.bf16 %v1115, %v1115
    %s1120 = smul.u32 4, 64
    %s1121 = smul.u32 %s1120, 4
    %s1122 = sshll.u32 %s1121, 4
    %1123 = dma.done [#allocation6], %s1122
    %s1124 = smul.u32 1, 4
    %s1125 = sshll.u32 %s1124, 4
    %1126 = dma.done %s44, %s1125
    %v1127 = vld [vmem:[#allocation2] sm:$0xff]
    %v1128 = vld [vmem:[#allocation2 + $0x8] sm:$0xff]
    %v1129 = vld [vmem:[#allocation2 + $0x10] sm:$0xff]
    %v1130 = vld [vmem:[#allocation2 + $0x18] sm:$0xff]
    %v1131 = vld [vmem:[#allocation2 + $0x20] sm:$0xff]
    %v1132 = vld [vmem:[#allocation2 + $0x28] sm:$0xff]
    %v1133 = vld [vmem:[#allocation2 + $0x30] sm:$0xff]
    %v1134 = vld [vmem:[#allocation2 + $0x38] sm:$0xff]
    %v1135 = vld [vmem:[#allocation2 + $0x40] sm:$0xff]
    %v1136 = vld [vmem:[#allocation2 + $0x48] sm:$0xff]
    %v1137 = vld [vmem:[#allocation2 + $0x50] sm:$0xff]
    %v1138 = vld [vmem:[#allocation2 + $0x58] sm:$0xff]
    %v1139 = vld [vmem:[#allocation2 + $0x60] sm:$0xff]
    %v1140 = vld [vmem:[#allocation2 + $0x68] sm:$0xff]
    %v1141 = vld [vmem:[#allocation2 + $0x70] sm:$0xff]
    %v1142 = vld [vmem:[#allocation2 + $0x78] sm:$0xff]
    %v1143 = vld [vmem:[#allocation2 + $0x80] sm:$0xff]
    %v1144 = vld [vmem:[#allocation2 + $0x88] sm:$0xff]
    %v1145 = vld [vmem:[#allocation2 + $0x90] sm:$0xff]
    %v1146 = vld [vmem:[#allocation2 + $0x98] sm:$0xff]
    %v1147 = vld [vmem:[#allocation2 + $0xa0] sm:$0xff]
    %v1148 = vld [vmem:[#allocation2 + $0xa8] sm:$0xff]
    %v1149 = vld [vmem:[#allocation2 + $0xb0] sm:$0xff]
    %v1150 = vld [vmem:[#allocation2 + $0xb8] sm:$0xff]
    %v1151 = vld [vmem:[#allocation2 + $0xc0] sm:$0xff]
    %v1152 = vld [vmem:[#allocation2 + $0xc8] sm:$0xff]
    %v1153 = vld [vmem:[#allocation2 + $0xd0] sm:$0xff]
    %v1154 = vld [vmem:[#allocation2 + $0xd8] sm:$0xff]
    %v1155 = vld [vmem:[#allocation2 + $0xe0] sm:$0xff]
    %v1156 = vld [vmem:[#allocation2 + $0xe8] sm:$0xff]
    %v1157 = vld [vmem:[#allocation2 + $0xf0] sm:$0xff]
    %v1158 = vld [vmem:[#allocation2 + $0xf8] sm:$0xff]
    %v1159 = vld [vmem:[#allocation2 + $0x100] sm:$0xff]
    %v1160 = vld [vmem:[#allocation2 + $0x108] sm:$0xff]
    %v1161 = vld [vmem:[#allocation2 + $0x110] sm:$0xff]
    %v1162 = vld [vmem:[#allocation2 + $0x118] sm:$0xff]
    %v1163 = vld [vmem:[#allocation2 + $0x120] sm:$0xff]
    %v1164 = vld [vmem:[#allocation2 + $0x128] sm:$0xff]
    %v1165 = vld [vmem:[#allocation2 + $0x130] sm:$0xff]
    %v1166 = vld [vmem:[#allocation2 + $0x138] sm:$0xff]
    %v1167 = vld [vmem:[#allocation2 + $0x140] sm:$0xff]
    %v1168 = vld [vmem:[#allocation2 + $0x148] sm:$0xff]
    %v1169 = vld [vmem:[#allocation2 + $0x150] sm:$0xff]
    %v1170 = vld [vmem:[#allocation2 + $0x158] sm:$0xff]
    %v1171 = vld [vmem:[#allocation2 + $0x160] sm:$0xff]
    %v1172 = vld [vmem:[#allocation2 + $0x168] sm:$0xff]
    %v1173 = vld [vmem:[#allocation2 + $0x170] sm:$0xff]
    %v1174 = vld [vmem:[#allocation2 + $0x178] sm:$0xff]
    %v1175 = vld [vmem:[#allocation2 + $0x180] sm:$0xff]
    %v1176 = vld [vmem:[#allocation2 + $0x188] sm:$0xff]
    %v1177 = vld [vmem:[#allocation2 + $0x190] sm:$0xff]
    %v1178 = vld [vmem:[#allocation2 + $0x198] sm:$0xff]
    %v1179 = vld [vmem:[#allocation2 + $0x1a0] sm:$0xff]
    %v1180 = vld [vmem:[#allocation2 + $0x1a8] sm:$0xff]
    %v1181 = vld [vmem:[#allocation2 + $0x1b0] sm:$0xff]
    %v1182 = vld [vmem:[#allocation2 + $0x1b8] sm:$0xff]
    %v1183 = vld [vmem:[#allocation2 + $0x1c0] sm:$0xff]
    %v1184 = vld [vmem:[#allocation2 + $0x1c8] sm:$0xff]
    %v1185 = vld [vmem:[#allocation2 + $0x1d0] sm:$0xff]
    %v1186 = vld [vmem:[#allocation2 + $0x1d8] sm:$0xff]
    %v1187 = vld [vmem:[#allocation2 + $0x1e0] sm:$0xff]
    %v1188 = vld [vmem:[#allocation2 + $0x1e8] sm:$0xff]
    %v1189 = vld [vmem:[#allocation2 + $0x1f0] sm:$0xff]
    %v1190 = vld [vmem:[#allocation2 + $0x1f8] sm:$0xff]
    %v1191 = vld [vmem:[#allocation2 + $0x200] sm:$0xff]
    %v1192 = vld [vmem:[#allocation2 + $0x208] sm:$0xff]
    %v1193 = vld [vmem:[#allocation2 + $0x210] sm:$0xff]
    %v1194 = vld [vmem:[#allocation2 + $0x218] sm:$0xff]
    %v1195 = vld [vmem:[#allocation2 + $0x220] sm:$0xff]
    %v1196 = vld [vmem:[#allocation2 + $0x228] sm:$0xff]
    %v1197 = vld [vmem:[#allocation2 + $0x230] sm:$0xff]
    %v1198 = vld [vmem:[#allocation2 + $0x238] sm:$0xff]
    %v1199 = vld [vmem:[#allocation2 + $0x240] sm:$0xff]
    %v1200 = vld [vmem:[#allocation2 + $0x248] sm:$0xff]
    %v1201 = vld [vmem:[#allocation2 + $0x250] sm:$0xff]
    %v1202 = vld [vmem:[#allocation2 + $0x258] sm:$0xff]
    %v1203 = vld [vmem:[#allocation2 + $0x260] sm:$0xff]
    %v1204 = vld [vmem:[#allocation2 + $0x268] sm:$0xff]
    %v1205 = vld [vmem:[#allocation2 + $0x270] sm:$0xff]
    %v1206 = vld [vmem:[#allocation2 + $0x278] sm:$0xff]
    %v1207 = vld [vmem:[#allocation2 + $0x280] sm:$0xff]
    %v1208 = vld [vmem:[#allocation2 + $0x288] sm:$0xff]
    %v1209 = vld [vmem:[#allocation2 + $0x290] sm:$0xff]
    %v1210 = vld [vmem:[#allocation2 + $0x298] sm:$0xff]
    %v1211 = vld [vmem:[#allocation2 + $0x2a0] sm:$0xff]
    %v1212 = vld [vmem:[#allocation2 + $0x2a8] sm:$0xff]
    %v1213 = vld [vmem:[#allocation2 + $0x2b0] sm:$0xff]
    %v1214 = vld [vmem:[#allocation2 + $0x2b8] sm:$0xff]
    %v1215 = vld [vmem:[#allocation2 + $0x2c0] sm:$0xff]
    %v1216 = vld [vmem:[#allocation2 + $0x2c8] sm:$0xff]
    %v1217 = vld [vmem:[#allocation2 + $0x2d0] sm:$0xff]
    %v1218 = vld [vmem:[#allocation2 + $0x2d8] sm:$0xff]
    %v1219 = vld [vmem:[#allocation2 + $0x2e0] sm:$0xff]
    %v1220 = vld [vmem:[#allocation2 + $0x2e8] sm:$0xff]
    %v1221 = vld [vmem:[#allocation2 + $0x2f0] sm:$0xff]
    %v1222 = vld [vmem:[#allocation2 + $0x2f8] sm:$0xff]
    %v1223 = vld [vmem:[#allocation2 + $0x300] sm:$0xff]
    %v1224 = vld [vmem:[#allocation2 + $0x308] sm:$0xff]
    %v1225 = vld [vmem:[#allocation2 + $0x310] sm:$0xff]
    %v1226 = vld [vmem:[#allocation2 + $0x318] sm:$0xff]
    %v1227 = vld [vmem:[#allocation2 + $0x320] sm:$0xff]
    %v1228 = vld [vmem:[#allocation2 + $0x328] sm:$0xff]
    %v1229 = vld [vmem:[#allocation2 + $0x330] sm:$0xff]
    %v1230 = vld [vmem:[#allocation2 + $0x338] sm:$0xff]
    %v1231 = vld [vmem:[#allocation2 + $0x340] sm:$0xff]
    %v1232 = vld [vmem:[#allocation2 + $0x348] sm:$0xff]
    %v1233 = vld [vmem:[#allocation2 + $0x350] sm:$0xff]
    %v1234 = vld [vmem:[#allocation2 + $0x358] sm:$0xff]
    %v1235 = vld [vmem:[#allocation2 + $0x360] sm:$0xff]
    %v1236 = vld [vmem:[#allocation2 + $0x368] sm:$0xff]
    %v1237 = vld [vmem:[#allocation2 + $0x370] sm:$0xff]
    %v1238 = vld [vmem:[#allocation2 + $0x378] sm:$0xff]
    %v1239 = vld [vmem:[#allocation2 + $0x380] sm:$0xff]
    %v1240 = vld [vmem:[#allocation2 + $0x388] sm:$0xff]
    %v1241 = vld [vmem:[#allocation2 + $0x390] sm:$0xff]
    %v1242 = vld [vmem:[#allocation2 + $0x398] sm:$0xff]
    %v1243 = vld [vmem:[#allocation2 + $0x3a0] sm:$0xff]
    %v1244 = vld [vmem:[#allocation2 + $0x3a8] sm:$0xff]
    %v1245 = vld [vmem:[#allocation2 + $0x3b0] sm:$0xff]
    %v1246 = vld [vmem:[#allocation2 + $0x3b8] sm:$0xff]
    %v1247 = vld [vmem:[#allocation2 + $0x3c0] sm:$0xff]
    %v1248 = vld [vmem:[#allocation2 + $0x3c8] sm:$0xff]
    %v1249 = vld [vmem:[#allocation2 + $0x3d0] sm:$0xff]
    %v1250 = vld [vmem:[#allocation2 + $0x3d8] sm:$0xff]
    %v1251 = vld [vmem:[#allocation2 + $0x3e0] sm:$0xff]
    %v1252 = vld [vmem:[#allocation2 + $0x3e8] sm:$0xff]
    %v1253 = vld [vmem:[#allocation2 + $0x3f0] sm:$0xff]
    %v1254 = vld [vmem:[#allocation2 + $0x3f8] sm:$0xff]
    %v1255 = vld [vmem:[#allocation3] sm:$0xf]
    %v1257 = vlaneseq
    %v1258 = vshrl.u32 %v1257, 7
    %v1259 = vsub.s32 0, %v1258
    %v1260 = vrot.slane %v1255, %v1259
    %v1261 = vlaneseq
    %v1262 = vshrl.u32 %v1261, 7
    %v1263 = vsub.s32 1, %v1262
    %v1264 = vrot.slane %v1255, %v1263
    %v1265 = vlaneseq
    %v1266 = vshrl.u32 %v1265, 7
    %v1267 = vsub.s32 2, %v1266
    %v1268 = vrot.slane %v1255, %v1267
    %v1269 = vlaneseq
    %v1270 = vshrl.u32 %v1269, 7
    %v1271 = vsub.s32 3, %v1270
    %v1272 = vrot.slane %v1255, %v1271
    %v1405 = vunpack.c.l.b16 %v1127
    %v1406 = vunpack.c.h.b16 %v1127
    %v1407 = vunpack.c.l.b16 %v1128
    %v1408 = vunpack.c.h.b16 %v1128
    %v1409 = vunpack.c.l.b16 %v1129
    %v1410 = vunpack.c.h.b16 %v1129
    %v1411 = vunpack.c.l.b16 %v1130
    %v1412 = vunpack.c.h.b16 %v1130
    %v1413 = vunpack.c.l.b16 %v1131
    %v1414 = vunpack.c.h.b16 %v1131
    %v1415 = vunpack.c.l.b16 %v1132
    %v1416 = vunpack.c.h.b16 %v1132
    %v1417 = vunpack.c.l.b16 %v1133
    %v1418 = vunpack.c.h.b16 %v1133
    %v1419 = vunpack.c.l.b16 %v1134
    %v1420 = vunpack.c.h.b16 %v1134
    %v1421 = vunpack.c.l.b16 %v1135
    %v1422 = vunpack.c.h.b16 %v1135
    %v1423 = vunpack.c.l.b16 %v1136
    %v1424 = vunpack.c.h.b16 %v1136
    %v1425 = vunpack.c.l.b16 %v1137
    %v1426 = vunpack.c.h.b16 %v1137
    %v1427 = vunpack.c.l.b16 %v1138
    %v1428 = vunpack.c.h.b16 %v1138
    %v1429 = vunpack.c.l.b16 %v1139
    %v1430 = vunpack.c.h.b16 %v1139
    %v1431 = vunpack.c.l.b16 %v1140
    %v1432 = vunpack.c.h.b16 %v1140
    %v1433 = vunpack.c.l.b16 %v1141
    %v1434 = vunpack.c.h.b16 %v1141
    %v1435 = vunpack.c.l.b16 %v1142
    %v1436 = vunpack.c.h.b16 %v1142
    %v1437 = vunpack.c.l.b16 %v1143
    %v1438 = vunpack.c.h.b16 %v1143
    %v1439 = vunpack.c.l.b16 %v1144
    %v1440 = vunpack.c.h.b16 %v1144
    %v1441 = vunpack.c.l.b16 %v1145
    %v1442 = vunpack.c.h.b16 %v1145
    %v1443 = vunpack.c.l.b16 %v1146
    %v1444 = vunpack.c.h.b16 %v1146
    %v1445 = vunpack.c.l.b16 %v1147
    %v1446 = vunpack.c.h.b16 %v1147
    %v1447 = vunpack.c.l.b16 %v1148
    %v1448 = vunpack.c.h.b16 %v1148
    %v1449 = vunpack.c.l.b16 %v1149
    %v1450 = vunpack.c.h.b16 %v1149
    %v1451 = vunpack.c.l.b16 %v1150
    %v1452 = vunpack.c.h.b16 %v1150
    %v1453 = vunpack.c.l.b16 %v1151
    %v1454 = vunpack.c.h.b16 %v1151
    %v1455 = vunpack.c.l.b16 %v1152
    %v1456 = vunpack.c.h.b16 %v1152
    %v1457 = vunpack.c.l.b16 %v1153
    %v1458 = vunpack.c.h.b16 %v1153
    %v1459 = vunpack.c.l.b16 %v1154
    %v1460 = vunpack.c.h.b16 %v1154
    %v1461 = vunpack.c.l.b16 %v1155
    %v1462 = vunpack.c.h.b16 %v1155
    %v1463 = vunpack.c.l.b16 %v1156
    %v1464 = vunpack.c.h.b16 %v1156
    %v1465 = vunpack.c.l.b16 %v1157
    %v1466 = vunpack.c.h.b16 %v1157
    %v1467 = vunpack.c.l.b16 %v1158
    %v1468 = vunpack.c.h.b16 %v1158
    %v1469 = vunpack.c.l.b16 %v1159
    %v1470 = vunpack.c.h.b16 %v1159
    %v1471 = vunpack.c.l.b16 %v1160
    %v1472 = vunpack.c.h.b16 %v1160
    %v1473 = vunpack.c.l.b16 %v1161
    %v1474 = vunpack.c.h.b16 %v1161
    %v1475 = vunpack.c.l.b16 %v1162
    %v1476 = vunpack.c.h.b16 %v1162
    %v1477 = vunpack.c.l.b16 %v1163
    %v1478 = vunpack.c.h.b16 %v1163
    %v1479 = vunpack.c.l.b16 %v1164
    %v1480 = vunpack.c.h.b16 %v1164
    %v1481 = vunpack.c.l.b16 %v1165
    %v1482 = vunpack.c.h.b16 %v1165
    %v1483 = vunpack.c.l.b16 %v1166
    %v1484 = vunpack.c.h.b16 %v1166
    %v1485 = vunpack.c.l.b16 %v1167
    %v1486 = vunpack.c.h.b16 %v1167
    %v1487 = vunpack.c.l.b16 %v1168
    %v1488 = vunpack.c.h.b16 %v1168
    %v1489 = vunpack.c.l.b16 %v1169
    %v1490 = vunpack.c.h.b16 %v1169
    %v1491 = vunpack.c.l.b16 %v1170
    %v1492 = vunpack.c.h.b16 %v1170
    %v1493 = vunpack.c.l.b16 %v1171
    %v1494 = vunpack.c.h.b16 %v1171
    %v1495 = vunpack.c.l.b16 %v1172
    %v1496 = vunpack.c.h.b16 %v1172
    %v1497 = vunpack.c.l.b16 %v1173
    %v1498 = vunpack.c.h.b16 %v1173
    %v1499 = vunpack.c.l.b16 %v1174
    %v1500 = vunpack.c.h.b16 %v1174
    %v1501 = vunpack.c.l.b16 %v1175
    %v1502 = vunpack.c.h.b16 %v1175
    %v1503 = vunpack.c.l.b16 %v1176
    %v1504 = vunpack.c.h.b16 %v1176
    %v1505 = vunpack.c.l.b16 %v1177
    %v1506 = vunpack.c.h.b16 %v1177
    %v1507 = vunpack.c.l.b16 %v1178
    %v1508 = vunpack.c.h.b16 %v1178
    %v1509 = vunpack.c.l.b16 %v1179
    %v1510 = vunpack.c.h.b16 %v1179
    %v1511 = vunpack.c.l.b16 %v1180
    %v1512 = vunpack.c.h.b16 %v1180
    %v1513 = vunpack.c.l.b16 %v1181
    %v1514 = vunpack.c.h.b16 %v1181
    %v1515 = vunpack.c.l.b16 %v1182
    %v1516 = vunpack.c.h.b16 %v1182
    %v1517 = vunpack.c.l.b16 %v1183
    %v1518 = vunpack.c.h.b16 %v1183
    %v1519 = vunpack.c.l.b16 %v1184
    %v1520 = vunpack.c.h.b16 %v1184
    %v1521 = vunpack.c.l.b16 %v1185
    %v1522 = vunpack.c.h.b16 %v1185
    %v1523 = vunpack.c.l.b16 %v1186
    %v1524 = vunpack.c.h.b16 %v1186
    %v1525 = vunpack.c.l.b16 %v1187
    %v1526 = vunpack.c.h.b16 %v1187
    %v1527 = vunpack.c.l.b16 %v1188
    %v1528 = vunpack.c.h.b16 %v1188
    %v1529 = vunpack.c.l.b16 %v1189
    %v1530 = vunpack.c.h.b16 %v1189
    %v1531 = vunpack.c.l.b16 %v1190
    %v1532 = vunpack.c.h.b16 %v1190
    %v1533 = vunpack.c.l.b16 %v1191
    %v1534 = vunpack.c.h.b16 %v1191
    %v1535 = vunpack.c.l.b16 %v1192
    %v1536 = vunpack.c.h.b16 %v1192
    %v1537 = vunpack.c.l.b16 %v1193
    %v1538 = vunpack.c.h.b16 %v1193
    %v1539 = vunpack.c.l.b16 %v1194
    %v1540 = vunpack.c.h.b16 %v1194
    %v1541 = vunpack.c.l.b16 %v1195
    %v1542 = vunpack.c.h.b16 %v1195
    %v1543 = vunpack.c.l.b16 %v1196
    %v1544 = vunpack.c.h.b16 %v1196
    %v1545 = vunpack.c.l.b16 %v1197
    %v1546 = vunpack.c.h.b16 %v1197
    %v1547 = vunpack.c.l.b16 %v1198
    %v1548 = vunpack.c.h.b16 %v1198
    %v1549 = vunpack.c.l.b16 %v1199
    %v1550 = vunpack.c.h.b16 %v1199
    %v1551 = vunpack.c.l.b16 %v1200
    %v1552 = vunpack.c.h.b16 %v1200
    %v1553 = vunpack.c.l.b16 %v1201
    %v1554 = vunpack.c.h.b16 %v1201
    %v1555 = vunpack.c.l.b16 %v1202
    %v1556 = vunpack.c.h.b16 %v1202
    %v1557 = vunpack.c.l.b16 %v1203
    %v1558 = vunpack.c.h.b16 %v1203
    %v1559 = vunpack.c.l.b16 %v1204
    %v1560 = vunpack.c.h.b16 %v1204
    %v1561 = vunpack.c.l.b16 %v1205
    %v1562 = vunpack.c.h.b16 %v1205
    %v1563 = vunpack.c.l.b16 %v1206
    %v1564 = vunpack.c.h.b16 %v1206
    %v1565 = vunpack.c.l.b16 %v1207
    %v1566 = vunpack.c.h.b16 %v1207
    %v1567 = vunpack.c.l.b16 %v1208
    %v1568 = vunpack.c.h.b16 %v1208
    %v1569 = vunpack.c.l.b16 %v1209
    %v1570 = vunpack.c.h.b16 %v1209
    %v1571 = vunpack.c.l.b16 %v1210
    %v1572 = vunpack.c.h.b16 %v1210
    %v1573 = vunpack.c.l.b16 %v1211
    %v1574 = vunpack.c.h.b16 %v1211
    %v1575 = vunpack.c.l.b16 %v1212
    %v1576 = vunpack.c.h.b16 %v1212
    %v1577 = vunpack.c.l.b16 %v1213
    %v1578 = vunpack.c.h.b16 %v1213
    %v1579 = vunpack.c.l.b16 %v1214
    %v1580 = vunpack.c.h.b16 %v1214
    %v1581 = vunpack.c.l.b16 %v1215
    %v1582 = vunpack.c.h.b16 %v1215
    %v1583 = vunpack.c.l.b16 %v1216
    %v1584 = vunpack.c.h.b16 %v1216
    %v1585 = vunpack.c.l.b16 %v1217
    %v1586 = vunpack.c.h.b16 %v1217
    %v1587 = vunpack.c.l.b16 %v1218
    %v1588 = vunpack.c.h.b16 %v1218
    %v1589 = vunpack.c.l.b16 %v1219
    %v1590 = vunpack.c.h.b16 %v1219
    %v1591 = vunpack.c.l.b16 %v1220
    %v1592 = vunpack.c.h.b16 %v1220
    %v1593 = vunpack.c.l.b16 %v1221
    %v1594 = vunpack.c.h.b16 %v1221
    %v1595 = vunpack.c.l.b16 %v1222
    %v1596 = vunpack.c.h.b16 %v1222
    %v1597 = vunpack.c.l.b16 %v1223
    %v1598 = vunpack.c.h.b16 %v1223
    %v1599 = vunpack.c.l.b16 %v1224
    %v1600 = vunpack.c.h.b16 %v1224
    %v1601 = vunpack.c.l.b16 %v1225
    %v1602 = vunpack.c.h.b16 %v1225
    %v1603 = vunpack.c.l.b16 %v1226
    %v1604 = vunpack.c.h.b16 %v1226
    %v1605 = vunpack.c.l.b16 %v1227
    %v1606 = vunpack.c.h.b16 %v1227
    %v1607 = vunpack.c.l.b16 %v1228
    %v1608 = vunpack.c.h.b16 %v1228
    %v1609 = vunpack.c.l.b16 %v1229
    %v1610 = vunpack.c.h.b16 %v1229
    %v1611 = vunpack.c.l.b16 %v1230
    %v1612 = vunpack.c.h.b16 %v1230
    %v1613 = vunpack.c.l.b16 %v1231
    %v1614 = vunpack.c.h.b16 %v1231
    %v1615 = vunpack.c.l.b16 %v1232
    %v1616 = vunpack.c.h.b16 %v1232
    %v1617 = vunpack.c.l.b16 %v1233
    %v1618 = vunpack.c.h.b16 %v1233
    %v1619 = vunpack.c.l.b16 %v1234
    %v1620 = vunpack.c.h.b16 %v1234
    %v1621 = vunpack.c.l.b16 %v1235
    %v1622 = vunpack.c.h.b16 %v1235
    %v1623 = vunpack.c.l.b16 %v1236
    %v1624 = vunpack.c.h.b16 %v1236
    %v1625 = vunpack.c.l.b16 %v1237
    %v1626 = vunpack.c.h.b16 %v1237
    %v1627 = vunpack.c.l.b16 %v1238
    %v1628 = vunpack.c.h.b16 %v1238
    %v1629 = vunpack.c.l.b16 %v1239
    %v1630 = vunpack.c.h.b16 %v1239
    %v1631 = vunpack.c.l.b16 %v1240
    %v1632 = vunpack.c.h.b16 %v1240
    %v1633 = vunpack.c.l.b16 %v1241
    %v1634 = vunpack.c.h.b16 %v1241
    %v1635 = vunpack.c.l.b16 %v1242
    %v1636 = vunpack.c.h.b16 %v1242
    %v1637 = vunpack.c.l.b16 %v1243
    %v1638 = vunpack.c.h.b16 %v1243
    %v1639 = vunpack.c.l.b16 %v1244
    %v1640 = vunpack.c.h.b16 %v1244
    %v1641 = vunpack.c.l.b16 %v1245
    %v1642 = vunpack.c.h.b16 %v1245
    %v1643 = vunpack.c.l.b16 %v1246
    %v1644 = vunpack.c.h.b16 %v1246
    %v1645 = vunpack.c.l.b16 %v1247
    %v1646 = vunpack.c.h.b16 %v1247
    %v1647 = vunpack.c.l.b16 %v1248
    %v1648 = vunpack.c.h.b16 %v1248
    %v1649 = vunpack.c.l.b16 %v1249
    %v1650 = vunpack.c.h.b16 %v1249
    %v1651 = vunpack.c.l.b16 %v1250
    %v1652 = vunpack.c.h.b16 %v1250
    %v1653 = vunpack.c.l.b16 %v1251
    %v1654 = vunpack.c.h.b16 %v1251
    %v1655 = vunpack.c.l.b16 %v1252
    %v1656 = vunpack.c.h.b16 %v1252
    %v1657 = vunpack.c.l.b16 %v1253
    %v1658 = vunpack.c.h.b16 %v1253
    %v1659 = vunpack.c.l.b16 %v1254
    %v1660 = vunpack.c.h.b16 %v1254
    %v1661 = vpack.c.b16 %v1409, %v1405
    %v1662 = vpack.c.b16 %v1410, %v1406
    %v1663 = vpack.c.b16 %v1411, %v1407
    %v1664 = vpack.c.b16 %v1412, %v1408
    %v1665 = vpack.c.b16 %v1417, %v1413
    %v1666 = vpack.c.b16 %v1418, %v1414
    %v1667 = vpack.c.b16 %v1419, %v1415
    %v1668 = vpack.c.b16 %v1420, %v1416
    %v1669 = vpack.c.b16 %v1425, %v1421
    %v1670 = vpack.c.b16 %v1426, %v1422
    %v1671 = vpack.c.b16 %v1427, %v1423
    %v1672 = vpack.c.b16 %v1428, %v1424
    %v1673 = vpack.c.b16 %v1433, %v1429
    %v1674 = vpack.c.b16 %v1434, %v1430
    %v1675 = vpack.c.b16 %v1435, %v1431
    %v1676 = vpack.c.b16 %v1436, %v1432
    %v1677 = vpack.c.b16 %v1441, %v1437
    %v1678 = vpack.c.b16 %v1442, %v1438
    %v1679 = vpack.c.b16 %v1443, %v1439
    %v1680 = vpack.c.b16 %v1444, %v1440
    %v1681 = vpack.c.b16 %v1449, %v1445
    %v1682 = vpack.c.b16 %v1450, %v1446
    %v1683 = vpack.c.b16 %v1451, %v1447
    %v1684 = vpack.c.b16 %v1452, %v1448
    %v1685 = vpack.c.b16 %v1457, %v1453
    %v1686 = vpack.c.b16 %v1458, %v1454
    %v1687 = vpack.c.b16 %v1459, %v1455
    %v1688 = vpack.c.b16 %v1460, %v1456
    %v1689 = vpack.c.b16 %v1465, %v1461
    %v1690 = vpack.c.b16 %v1466, %v1462
    %v1691 = vpack.c.b16 %v1467, %v1463
    %v1692 = vpack.c.b16 %v1468, %v1464
    %v1693 = vpack.c.b16 %v1473, %v1469
    %v1694 = vpack.c.b16 %v1474, %v1470
    %v1695 = vpack.c.b16 %v1475, %v1471
    %v1696 = vpack.c.b16 %v1476, %v1472
    %v1697 = vpack.c.b16 %v1481, %v1477
    %v1698 = vpack.c.b16 %v1482, %v1478
    %v1699 = vpack.c.b16 %v1483, %v1479
    %v1700 = vpack.c.b16 %v1484, %v1480
    %v1701 = vpack.c.b16 %v1489, %v1485
    %v1702 = vpack.c.b16 %v1490, %v1486
    %v1703 = vpack.c.b16 %v1491, %v1487
    %v1704 = vpack.c.b16 %v1492, %v1488
    %v1705 = vpack.c.b16 %v1497, %v1493
    %v1706 = vpack.c.b16 %v1498, %v1494
    %v1707 = vpack.c.b16 %v1499, %v1495
    %v1708 = vpack.c.b16 %v1500, %v1496
    %v1709 = vpack.c.b16 %v1505, %v1501
    %v1710 = vpack.c.b16 %v1506, %v1502
    %v1711 = vpack.c.b16 %v1507, %v1503
    %v1712 = vpack.c.b16 %v1508, %v1504
    %v1713 = vpack.c.b16 %v1513, %v1509
    %v1714 = vpack.c.b16 %v1514, %v1510
    %v1715 = vpack.c.b16 %v1515, %v1511
    %v1716 = vpack.c.b16 %v1516, %v1512
    %v1717 = vpack.c.b16 %v1521, %v1517
    %v1718 = vpack.c.b16 %v1522, %v1518
    %v1719 = vpack.c.b16 %v1523, %v1519
    %v1720 = vpack.c.b16 %v1524, %v1520
    %v1721 = vpack.c.b16 %v1529, %v1525
    %v1722 = vpack.c.b16 %v1530, %v1526
    %v1723 = vpack.c.b16 %v1531, %v1527
    %v1724 = vpack.c.b16 %v1532, %v1528
    %v1725 = vpack.c.b16 %v1537, %v1533
    %v1726 = vpack.c.b16 %v1538, %v1534
    %v1727 = vpack.c.b16 %v1539, %v1535
    %v1728 = vpack.c.b16 %v1540, %v1536
    %v1729 = vpack.c.b16 %v1545, %v1541
    %v1730 = vpack.c.b16 %v1546, %v1542
    %v1731 = vpack.c.b16 %v1547, %v1543
    %v1732 = vpack.c.b16 %v1548, %v1544
    %v1733 = vpack.c.b16 %v1553, %v1549
    %v1734 = vpack.c.b16 %v1554, %v1550
    %v1735 = vpack.c.b16 %v1555, %v1551
    %v1736 = vpack.c.b16 %v1556, %v1552
    %v1737 = vpack.c.b16 %v1561, %v1557
    %v1738 = vpack.c.b16 %v1562, %v1558
    %v1739 = vpack.c.b16 %v1563, %v1559
    %v1740 = vpack.c.b16 %v1564, %v1560
    %v1741 = vpack.c.b16 %v1569, %v1565
    %v1742 = vpack.c.b16 %v1570, %v1566
    %v1743 = vpack.c.b16 %v1571, %v1567
    %v1744 = vpack.c.b16 %v1572, %v1568
    %v1745 = vpack.c.b16 %v1577, %v1573
    %v1746 = vpack.c.b16 %v1578, %v1574
    %v1747 = vpack.c.b16 %v1579, %v1575
    %v1748 = vpack.c.b16 %v1580, %v1576
    %v1749 = vpack.c.b16 %v1585, %v1581
    %v1750 = vpack.c.b16 %v1586, %v1582
    %v1751 = vpack.c.b16 %v1587, %v1583
    %v1752 = vpack.c.b16 %v1588, %v1584
    %v1753 = vpack.c.b16 %v1593, %v1589
    %v1754 = vpack.c.b16 %v1594, %v1590
    %v1755 = vpack.c.b16 %v1595, %v1591
    %v1756 = vpack.c.b16 %v1596, %v1592
    %v1757 = vpack.c.b16 %v1601, %v1597
    %v1758 = vpack.c.b16 %v1602, %v1598
    %v1759 = vpack.c.b16 %v1603, %v1599
    %v1760 = vpack.c.b16 %v1604, %v1600
    %v1761 = vpack.c.b16 %v1609, %v1605
    %v1762 = vpack.c.b16 %v1610, %v1606
    %v1763 = vpack.c.b16 %v1611, %v1607
    %v1764 = vpack.c.b16 %v1612, %v1608
    %v1765 = vpack.c.b16 %v1617, %v1613
    %v1766 = vpack.c.b16 %v1618, %v1614
    %v1767 = vpack.c.b16 %v1619, %v1615
    %v1768 = vpack.c.b16 %v1620, %v1616
    %v1769 = vpack.c.b16 %v1625, %v1621
    %v1770 = vpack.c.b16 %v1626, %v1622
    %v1771 = vpack.c.b16 %v1627, %v1623
    %v1772 = vpack.c.b16 %v1628, %v1624
    %v1773 = vpack.c.b16 %v1633, %v1629
    %v1774 = vpack.c.b16 %v1634, %v1630
    %v1775 = vpack.c.b16 %v1635, %v1631
    %v1776 = vpack.c.b16 %v1636, %v1632
    %v1777 = vpack.c.b16 %v1641, %v1637
    %v1778 = vpack.c.b16 %v1642, %v1638
    %v1779 = vpack.c.b16 %v1643, %v1639
    %v1780 = vpack.c.b16 %v1644, %v1640
    %v1781 = vpack.c.b16 %v1649, %v1645
    %v1782 = vpack.c.b16 %v1650, %v1646
    %v1783 = vpack.c.b16 %v1651, %v1647
    %v1784 = vpack.c.b16 %v1652, %v1648
    %v1785 = vpack.c.b16 %v1657, %v1653
    %v1786 = vpack.c.b16 %v1658, %v1654
    %v1787 = vpack.c.b16 %v1659, %v1655
    %v1788 = vpack.c.b16 %v1660, %v1656
    %1917 = vmatprep.subr.bf16.mxu0 %v1690
    %1918 = vmatpush1.bf16.msra.mxu0 %v1689
    %1919 = vmatprep.subr.bf16.mxu0 %v1686
    %1920 = vmatpush1.bf16.msra.mxu0 %v1685
    %1921 = vmatprep.subr.bf16.mxu0 %v1682
    %1922 = vmatpush1.bf16.msra.mxu0 %v1681
    %1923 = vmatprep.subr.bf16.mxu0 %v1678
    %1924 = vmatpush1.bf16.msra.mxu0 %v1677
    %1925 = vmatprep.subr.bf16.mxu0 %v1674
    %1926 = vmatpush1.bf16.msra.mxu0 %v1673
    %1927 = vmatprep.subr.bf16.mxu0 %v1670
    %1928 = vmatpush1.bf16.msra.mxu0 %v1669
    %1929 = vmatprep.subr.bf16.mxu0 %v1666
    %1930 = vmatpush1.bf16.msra.mxu0 %v1665
    %1931 = vmatprep.subr.bf16.mxu0 %v1662
    %1932 = vmatpush1.bf16.msra.mxu0 %v1661
    %1933 = vmatprep.subr.bf16.mxu0 %v1722
    %1934 = vmatpush2.bf16.msra.mxu0 %v1721
    %1935 = vmatprep.subr.bf16.mxu0 %v1718
    %1936 = vmatpush2.bf16.msra.mxu0 %v1717
    %1937 = vmatprep.subr.bf16.mxu0 %v1714
    %1938 = vmatpush2.bf16.msra.mxu0 %v1713
    %1939 = vmatprep.subr.bf16.mxu0 %v1710
    %1940 = vmatpush2.bf16.msra.mxu0 %v1709
    %1941 = vmatprep.subr.bf16.mxu0 %v1706
    %1942 = vmatpush2.bf16.msra.mxu0 %v1705
    %1943 = vmatprep.subr.bf16.mxu0 %v1702
    %1944 = vmatpush2.bf16.msra.mxu0 %v1701
    %1945 = vmatprep.subr.bf16.mxu0 %v1698
    %1946 = vmatpush2.bf16.msra.mxu0 %v1697
    %1947 = vmatprep.subr.bf16.mxu0 %v1694
    %1948 = vmatpush2.bf16.msra.mxu0 %v1693
    %1949 = vmatprep.mubr.bf16.mxu0 %v1117
    %1950 = vmatmul.mubr.bf16.gmra.mxu0 %v1116
    %v1951 = vpop.f32.mrf.mxu0
    %v1952 = vadd.f32 %v1260, %v1951
    %v1953 = vpop.f32.mrf.mxu0
    %v1954 = vadd.f32 %v1264, %v1953
    %v1955 = vpop.f32.mrf.mxu0
    %v1956 = vpop.f32.mrf.mxu0
    %1957 = vdwg.mxu0
    %1958 = vmatprep.subr.bf16.mxu0 %v1754
    %1959 = vmatpush1.bf16.msra.mxu0 %v1753
    %1960 = vmatprep.subr.bf16.mxu0 %v1750
    %1961 = vmatpush1.bf16.msra.mxu0 %v1749
    %1962 = vmatprep.subr.bf16.mxu0 %v1746
    %1963 = vmatpush1.bf16.msra.mxu0 %v1745
    %1964 = vmatprep.subr.bf16.mxu0 %v1742
    %1965 = vmatpush1.bf16.msra.mxu0 %v1741
    %1966 = vmatprep.subr.bf16.mxu0 %v1738
    %1967 = vmatpush1.bf16.msra.mxu0 %v1737
    %1968 = vmatprep.subr.bf16.mxu0 %v1734
    %1969 = vmatpush1.bf16.msra.mxu0 %v1733
    %1970 = vmatprep.subr.bf16.mxu0 %v1730
    %1971 = vmatpush1.bf16.msra.mxu0 %v1729
    %1972 = vmatprep.subr.bf16.mxu0 %v1726
    %1973 = vmatpush1.bf16.msra.mxu0 %v1725
    %1974 = vmatprep.subr.bf16.mxu0 %v1786
    %1975 = vmatpush2.bf16.msra.mxu0 %v1785
    %1976 = vmatprep.subr.bf16.mxu0 %v1782
    %1977 = vmatpush2.bf16.msra.mxu0 %v1781
    %1978 = vmatprep.subr.bf16.mxu0 %v1778
    %1979 = vmatpush2.bf16.msra.mxu0 %v1777
    %1980 = vmatprep.subr.bf16.mxu0 %v1774
    %1981 = vmatpush2.bf16.msra.mxu0 %v1773
    %1982 = vmatprep.subr.bf16.mxu0 %v1770
    %1983 = vmatpush2.bf16.msra.mxu0 %v1769
    %1984 = vmatprep.subr.bf16.mxu0 %v1766
    %1985 = vmatpush2.bf16.msra.mxu0 %v1765
    %1986 = vmatprep.subr.bf16.mxu0 %v1762
    %1987 = vmatpush2.bf16.msra.mxu0 %v1761
    %1988 = vmatprep.subr.bf16.mxu0 %v1758
    %1989 = vmatpush2.bf16.msra.mxu0 %v1757
    %1990 = vmatprep.mubr.bf16.mxu0 %v1119
    %1991 = vmatmul.mubr.bf16.gmra.mxu0 %v1118
    %v1992 = vpop.f32.mrf.mxu0
    %v1993 = vadd.f32 %v1952, %v1992
    %v1994 = vpop.f32.mrf.mxu0
    %v1995 = vadd.f32 %v1954, %v1994
    %v1996 = vpop.f32.mrf.mxu0
    %v1997 = vpop.f32.mrf.mxu0
    %1998 = vdwg.mxu0
    %1999 = vmatprep.subr.bf16.mxu0 %v1692
    %2000 = vmatpush1.bf16.msra.mxu0 %v1691
    %2001 = vmatprep.subr.bf16.mxu0 %v1688
    %2002 = vmatpush1.bf16.msra.mxu0 %v1687
    %2003 = vmatprep.subr.bf16.mxu0 %v1684
    %2004 = vmatpush1.bf16.msra.mxu0 %v1683
    %2005 = vmatprep.subr.bf16.mxu0 %v1680
    %2006 = vmatpush1.bf16.msra.mxu0 %v1679
    %2007 = vmatprep.subr.bf16.mxu0 %v1676
    %2008 = vmatpush1.bf16.msra.mxu0 %v1675
    %2009 = vmatprep.subr.bf16.mxu0 %v1672
    %2010 = vmatpush1.bf16.msra.mxu0 %v1671
    %2011 = vmatprep.subr.bf16.mxu0 %v1668
    %2012 = vmatpush1.bf16.msra.mxu0 %v1667
    %2013 = vmatprep.subr.bf16.mxu0 %v1664
    %2014 = vmatpush1.bf16.msra.mxu0 %v1663
    %2015 = vmatprep.subr.bf16.mxu0 %v1724
    %2016 = vmatpush2.bf16.msra.mxu0 %v1723
    %2017 = vmatprep.subr.bf16.mxu0 %v1720
    %2018 = vmatpush2.bf16.msra.mxu0 %v1719
    %2019 = vmatprep.subr.bf16.mxu0 %v1716
    %2020 = vmatpush2.bf16.msra.mxu0 %v1715
    %2021 = vmatprep.subr.bf16.mxu0 %v1712
    %2022 = vmatpush2.bf16.msra.mxu0 %v1711
    %2023 = vmatprep.subr.bf16.mxu0 %v1708
    %2024 = vmatpush2.bf16.msra.mxu0 %v1707
    %2025 = vmatprep.subr.bf16.mxu0 %v1704
    %2026 = vmatpush2.bf16.msra.mxu0 %v1703
    %2027 = vmatprep.subr.bf16.mxu0 %v1700
    %2028 = vmatpush2.bf16.msra.mxu0 %v1699
    %2029 = vmatprep.subr.bf16.mxu0 %v1696
    %2030 = vmatpush2.bf16.msra.mxu0 %v1695
    %2031 = vmatprep.mubr.bf16.mxu0 %v1117
    %2032 = vmatmul.mubr.bf16.gmra.mxu0 %v1116
    %v2033 = vpop.f32.mrf.mxu0
    %v2034 = vadd.f32 %v1268, %v2033
    %v2035 = vpop.f32.mrf.mxu0
    %v2036 = vadd.f32 %v1272, %v2035
    %v2037 = vpop.f32.mrf.mxu0
    %v2038 = vpop.f32.mrf.mxu0
    %2039 = vdwg.mxu0
    %2040 = vmatprep.subr.bf16.mxu0 %v1756
    %2041 = vmatpush1.bf16.msra.mxu0 %v1755
    %2042 = vmatprep.subr.bf16.mxu0 %v1752
    %2043 = vmatpush1.bf16.msra.mxu0 %v1751
    %2044 = vmatprep.subr.bf16.mxu0 %v1748
    %2045 = vmatpush1.bf16.msra.mxu0 %v1747
    %2046 = vmatprep.subr.bf16.mxu0 %v1744
    %2047 = vmatpush1.bf16.msra.mxu0 %v1743
    %2048 = vmatprep.subr.bf16.mxu0 %v1740
    %2049 = vmatpush1.bf16.msra.mxu0 %v1739
    %2050 = vmatprep.subr.bf16.mxu0 %v1736
    %2051 = vmatpush1.bf16.msra.mxu0 %v1735
    %2052 = vmatprep.subr.bf16.mxu0 %v1732
    %2053 = vmatpush1.bf16.msra.mxu0 %v1731
    %2054 = vmatprep.subr.bf16.mxu0 %v1728
    %2055 = vmatpush1.bf16.msra.mxu0 %v1727
    %2056 = vmatprep.subr.bf16.mxu0 %v1788
    %2057 = vmatpush2.bf16.msra.mxu0 %v1787
    %2058 = vmatprep.subr.bf16.mxu0 %v1784
    %2059 = vmatpush2.bf16.msra.mxu0 %v1783
    %2060 = vmatprep.subr.bf16.mxu0 %v1780
    %2061 = vmatpush2.bf16.msra.mxu0 %v1779
    %2062 = vmatprep.subr.bf16.mxu0 %v1776
    %2063 = vmatpush2.bf16.msra.mxu0 %v1775
    %2064 = vmatprep.subr.bf16.mxu0 %v1772
    %2065 = vmatpush2.bf16.msra.mxu0 %v1771
    %2066 = vmatprep.subr.bf16.mxu0 %v1768
    %2067 = vmatpush2.bf16.msra.mxu0 %v1767
    %2068 = vmatprep.subr.bf16.mxu0 %v1764
    %2069 = vmatpush2.bf16.msra.mxu0 %v1763
    %2070 = vmatprep.subr.bf16.mxu0 %v1760
    %2071 = vmatpush2.bf16.msra.mxu0 %v1759
    %2072 = vmatprep.mubr.bf16.mxu0 %v1119
    %2073 = vmatmul.mubr.bf16.gmra.mxu0 %v1118
    %v2074 = vpop.f32.mrf.mxu0
    %v2075 = vadd.f32 %v2034, %v2074
    %v2076 = vpop.f32.mrf.mxu0
    %v2077 = vadd.f32 %v2036, %v2076
    %v2078 = vpop.f32.mrf.mxu0
    %v2079 = vpop.f32.mrf.mxu0
    %2080 = vdwg.mxu0
    %v2081 = vmax.f32 %v1993, 0.0
    %v2082 = vmax.f32 %v1995, 0.0
    %v2083 = vmax.f32 %v2075, 0.0
    %v2084 = vmax.f32 %v2077, 0.0
    %v2085 = vpack.c.bf16 %v2081, %v2081
    %v2086 = vpack.c.bf16 %v2082, %v2082
    %v2087 = vpack.c.bf16 %v2083, %v2083
    %v2088 = vpack.c.bf16 %v2084, %v2084
    %s2089 = sshll.u32 %s1121, 4
    %2090 = dma.done %s91, %s2089
    %s2091 = sshll.u32 %s1124, 4
    %2092 = dma.done %s103, %s2091
    %v2093 = vld [vmem:[#allocation4] sm:$0xff]
    %v2094 = vld [vmem:[#allocation4 + $0x8] sm:$0xff]
    %v2095 = vld [vmem:[#allocation4 + $0x10] sm:$0xff]
    %v2096 = vld [vmem:[#allocation4 + $0x18] sm:$0xff]
    %v2097 = vld [vmem:[#allocation4 + $0x20] sm:$0xff]
    %v2098 = vld [vmem:[#allocation4 + $0x28] sm:$0xff]
    %v2099 = vld [vmem:[#allocation4 + $0x30] sm:$0xff]
    %v2100 = vld [vmem:[#allocation4 + $0x38] sm:$0xff]
    %v2101 = vld [vmem:[#allocation4 + $0x40] sm:$0xff]
    %v2102 = vld [vmem:[#allocation4 + $0x48] sm:$0xff]
    %v2103 = vld [vmem:[#allocation4 + $0x50] sm:$0xff]
    %v2104 = vld [vmem:[#allocation4 + $0x58] sm:$0xff]
    %v2105 = vld [vmem:[#allocation4 + $0x60] sm:$0xff]
    %v2106 = vld [vmem:[#allocation4 + $0x68] sm:$0xff]
    %v2107 = vld [vmem:[#allocation4 + $0x70] sm:$0xff]
    %v2108 = vld [vmem:[#allocation4 + $0x78] sm:$0xff]
    %v2109 = vld [vmem:[#allocation4 + $0x80] sm:$0xff]
    %v2110 = vld [vmem:[#allocation4 + $0x88] sm:$0xff]
    %v2111 = vld [vmem:[#allocation4 + $0x90] sm:$0xff]
    %v2112 = vld [vmem:[#allocation4 + $0x98] sm:$0xff]
    %v2113 = vld [vmem:[#allocation4 + $0xa0] sm:$0xff]
    %v2114 = vld [vmem:[#allocation4 + $0xa8] sm:$0xff]
    %v2115 = vld [vmem:[#allocation4 + $0xb0] sm:$0xff]
    %v2116 = vld [vmem:[#allocation4 + $0xb8] sm:$0xff]
    %v2117 = vld [vmem:[#allocation4 + $0xc0] sm:$0xff]
    %v2118 = vld [vmem:[#allocation4 + $0xc8] sm:$0xff]
    %v2119 = vld [vmem:[#allocation4 + $0xd0] sm:$0xff]
    %v2120 = vld [vmem:[#allocation4 + $0xd8] sm:$0xff]
    %v2121 = vld [vmem:[#allocation4 + $0xe0] sm:$0xff]
    %v2122 = vld [vmem:[#allocation4 + $0xe8] sm:$0xff]
    %v2123 = vld [vmem:[#allocation4 + $0xf0] sm:$0xff]
    %v2124 = vld [vmem:[#allocation4 + $0xf8] sm:$0xff]
    %v2125 = vld [vmem:[#allocation4 + $0x100] sm:$0xff]
    %v2126 = vld [vmem:[#allocation4 + $0x108] sm:$0xff]
    %v2127 = vld [vmem:[#allocation4 + $0x110] sm:$0xff]
    %v2128 = vld [vmem:[#allocation4 + $0x118] sm:$0xff]
    %v2129 = vld [vmem:[#allocation4 + $0x120] sm:$0xff]
    %v2130 = vld [vmem:[#allocation4 + $0x128] sm:$0xff]
    %v2131 = vld [vmem:[#allocation4 + $0x130] sm:$0xff]
    %v2132 = vld [vmem:[#allocation4 + $0x138] sm:$0xff]
    %v2133 = vld [vmem:[#allocation4 + $0x140] sm:$0xff]
    %v2134 = vld [vmem:[#allocation4 + $0x148] sm:$0xff]
    %v2135 = vld [vmem:[#allocation4 + $0x150] sm:$0xff]
    %v2136 = vld [vmem:[#allocation4 + $0x158] sm:$0xff]
    %v2137 = vld [vmem:[#allocation4 + $0x160] sm:$0xff]
    %v2138 = vld [vmem:[#allocation4 + $0x168] sm:$0xff]
    %v2139 = vld [vmem:[#allocation4 + $0x170] sm:$0xff]
    %v2140 = vld [vmem:[#allocation4 + $0x178] sm:$0xff]
    %v2141 = vld [vmem:[#allocation4 + $0x180] sm:$0xff]
    %v2142 = vld [vmem:[#allocation4 + $0x188] sm:$0xff]
    %v2143 = vld [vmem:[#allocation4 + $0x190] sm:$0xff]
    %v2144 = vld [vmem:[#allocation4 + $0x198] sm:$0xff]
    %v2145 = vld [vmem:[#allocation4 + $0x1a0] sm:$0xff]
    %v2146 = vld [vmem:[#allocation4 + $0x1a8] sm:$0xff]
    %v2147 = vld [vmem:[#allocation4 + $0x1b0] sm:$0xff]
    %v2148 = vld [vmem:[#allocation4 + $0x1b8] sm:$0xff]
    %v2149 = vld [vmem:[#allocation4 + $0x1c0] sm:$0xff]
    %v2150 = vld [vmem:[#allocation4 + $0x1c8] sm:$0xff]
    %v2151 = vld [vmem:[#allocation4 + $0x1d0] sm:$0xff]
    %v2152 = vld [vmem:[#allocation4 + $0x1d8] sm:$0xff]
    %v2153 = vld [vmem:[#allocation4 + $0x1e0] sm:$0xff]
    %v2154 = vld [vmem:[#allocation4 + $0x1e8] sm:$0xff]
    %v2155 = vld [vmem:[#allocation4 + $0x1f0] sm:$0xff]
    %v2156 = vld [vmem:[#allocation4 + $0x1f8] sm:$0xff]
    %v2157 = vld [vmem:[#allocation4 + $0x200] sm:$0xff]
    %v2158 = vld [vmem:[#allocation4 + $0x208] sm:$0xff]
    %v2159 = vld [vmem:[#allocation4 + $0x210] sm:$0xff]
    %v2160 = vld [vmem:[#allocation4 + $0x218] sm:$0xff]
    %v2161 = vld [vmem:[#allocation4 + $0x220] sm:$0xff]
    %v2162 = vld [vmem:[#allocation4 + $0x228] sm:$0xff]
    %v2163 = vld [vmem:[#allocation4 + $0x230] sm:$0xff]
    %v2164 = vld [vmem:[#allocation4 + $0x238] sm:$0xff]
    %v2165 = vld [vmem:[#allocation4 + $0x240] sm:$0xff]
    %v2166 = vld [vmem:[#allocation4 + $0x248] sm:$0xff]
    %v2167 = vld [vmem:[#allocation4 + $0x250] sm:$0xff]
    %v2168 = vld [vmem:[#allocation4 + $0x258] sm:$0xff]
    %v2169 = vld [vmem:[#allocation4 + $0x260] sm:$0xff]
    %v2170 = vld [vmem:[#allocation4 + $0x268] sm:$0xff]
    %v2171 = vld [vmem:[#allocation4 + $0x270] sm:$0xff]
    %v2172 = vld [vmem:[#allocation4 + $0x278] sm:$0xff]
    %v2173 = vld [vmem:[#allocation4 + $0x280] sm:$0xff]
    %v2174 = vld [vmem:[#allocation4 + $0x288] sm:$0xff]
    %v2175 = vld [vmem:[#allocation4 + $0x290] sm:$0xff]
    %v2176 = vld [vmem:[#allocation4 + $0x298] sm:$0xff]
    %v2177 = vld [vmem:[#allocation4 + $0x2a0] sm:$0xff]
    %v2178 = vld [vmem:[#allocation4 + $0x2a8] sm:$0xff]
    %v2179 = vld [vmem:[#allocation4 + $0x2b0] sm:$0xff]
    %v2180 = vld [vmem:[#allocation4 + $0x2b8] sm:$0xff]
    %v2181 = vld [vmem:[#allocation4 + $0x2c0] sm:$0xff]
    %v2182 = vld [vmem:[#allocation4 + $0x2c8] sm:$0xff]
    %v2183 = vld [vmem:[#allocation4 + $0x2d0] sm:$0xff]
    %v2184 = vld [vmem:[#allocation4 + $0x2d8] sm:$0xff]
    %v2185 = vld [vmem:[#allocation4 + $0x2e0] sm:$0xff]
    %v2186 = vld [vmem:[#allocation4 + $0x2e8] sm:$0xff]
    %v2187 = vld [vmem:[#allocation4 + $0x2f0] sm:$0xff]
    %v2188 = vld [vmem:[#allocation4 + $0x2f8] sm:$0xff]
    %v2189 = vld [vmem:[#allocation4 + $0x300] sm:$0xff]
    %v2190 = vld [vmem:[#allocation4 + $0x308] sm:$0xff]
    %v2191 = vld [vmem:[#allocation4 + $0x310] sm:$0xff]
    %v2192 = vld [vmem:[#allocation4 + $0x318] sm:$0xff]
    %v2193 = vld [vmem:[#allocation4 + $0x320] sm:$0xff]
    %v2194 = vld [vmem:[#allocation4 + $0x328] sm:$0xff]
    %v2195 = vld [vmem:[#allocation4 + $0x330] sm:$0xff]
    %v2196 = vld [vmem:[#allocation4 + $0x338] sm:$0xff]
    %v2197 = vld [vmem:[#allocation4 + $0x340] sm:$0xff]
    %v2198 = vld [vmem:[#allocation4 + $0x348] sm:$0xff]
    %v2199 = vld [vmem:[#allocation4 + $0x350] sm:$0xff]
    %v2200 = vld [vmem:[#allocation4 + $0x358] sm:$0xff]
    %v2201 = vld [vmem:[#allocation4 + $0x360] sm:$0xff]
    %v2202 = vld [vmem:[#allocation4 + $0x368] sm:$0xff]
    %v2203 = vld [vmem:[#allocation4 + $0x370] sm:$0xff]
    %v2204 = vld [vmem:[#allocation4 + $0x378] sm:$0xff]
    %v2205 = vld [vmem:[#allocation4 + $0x380] sm:$0xff]
    %v2206 = vld [vmem:[#allocation4 + $0x388] sm:$0xff]
    %v2207 = vld [vmem:[#allocation4 + $0x390] sm:$0xff]
    %v2208 = vld [vmem:[#allocation4 + $0x398] sm:$0xff]
    %v2209 = vld [vmem:[#allocation4 + $0x3a0] sm:$0xff]
    %v2210 = vld [vmem:[#allocation4 + $0x3a8] sm:$0xff]
    %v2211 = vld [vmem:[#allocation4 + $0x3b0] sm:$0xff]
    %v2212 = vld [vmem:[#allocation4 + $0x3b8] sm:$0xff]
    %v2213 = vld [vmem:[#allocation4 + $0x3c0] sm:$0xff]
    %v2214 = vld [vmem:[#allocation4 + $0x3c8] sm:$0xff]
    %v2215 = vld [vmem:[#allocation4 + $0x3d0] sm:$0xff]
    %v2216 = vld [vmem:[#allocation4 + $0x3d8] sm:$0xff]
    %v2217 = vld [vmem:[#allocation4 + $0x3e0] sm:$0xff]
    %v2218 = vld [vmem:[#allocation4 + $0x3e8] sm:$0xff]
    %v2219 = vld [vmem:[#allocation4 + $0x3f0] sm:$0xff]
    %v2220 = vld [vmem:[#allocation4 + $0x3f8] sm:$0xff]
    %v2221 = vld [vmem:[#allocation5] sm:$0xf]
    %v2223 = vlaneseq
    %v2224 = vshrl.u32 %v2223, 7
    %v2225 = vsub.s32 0, %v2224
    %v2226 = vrot.slane %v2221, %v2225
    %v2227 = vlaneseq
    %v2228 = vshrl.u32 %v2227, 7
    %v2229 = vsub.s32 1, %v2228
    %v2230 = vrot.slane %v2221, %v2229
    %v2231 = vlaneseq
    %v2232 = vshrl.u32 %v2231, 7
    %v2233 = vsub.s32 2, %v2232
    %v2234 = vrot.slane %v2221, %v2233
    %v2235 = vlaneseq
    %v2236 = vshrl.u32 %v2235, 7
    %v2237 = vsub.s32 3, %v2236
    %v2238 = vrot.slane %v2221, %v2237
    %v2371 = vunpack.c.l.b16 %v2093
    %v2372 = vunpack.c.h.b16 %v2093
    %v2373 = vunpack.c.l.b16 %v2094
    %v2374 = vunpack.c.h.b16 %v2094
    %v2375 = vunpack.c.l.b16 %v2095
    %v2376 = vunpack.c.h.b16 %v2095
    %v2377 = vunpack.c.l.b16 %v2096
    %v2378 = vunpack.c.h.b16 %v2096
    %v2379 = vunpack.c.l.b16 %v2097
    %v2380 = vunpack.c.h.b16 %v2097
    %v2381 = vunpack.c.l.b16 %v2098
    %v2382 = vunpack.c.h.b16 %v2098
    %v2383 = vunpack.c.l.b16 %v2099
    %v2384 = vunpack.c.h.b16 %v2099
    %v2385 = vunpack.c.l.b16 %v2100
    %v2386 = vunpack.c.h.b16 %v2100
    %v2387 = vunpack.c.l.b16 %v2101
    %v2388 = vunpack.c.h.b16 %v2101
    %v2389 = vunpack.c.l.b16 %v2102
    %v2390 = vunpack.c.h.b16 %v2102
    %v2391 = vunpack.c.l.b16 %v2103
    %v2392 = vunpack.c.h.b16 %v2103
    %v2393 = vunpack.c.l.b16 %v2104
    %v2394 = vunpack.c.h.b16 %v2104
    %v2395 = vunpack.c.l.b16 %v2105
    %v2396 = vunpack.c.h.b16 %v2105
    %v2397 = vunpack.c.l.b16 %v2106
    %v2398 = vunpack.c.h.b16 %v2106
    %v2399 = vunpack.c.l.b16 %v2107
    %v2400 = vunpack.c.h.b16 %v2107
    %v2401 = vunpack.c.l.b16 %v2108
    %v2402 = vunpack.c.h.b16 %v2108
    %v2403 = vunpack.c.l.b16 %v2109
    %v2404 = vunpack.c.h.b16 %v2109
    %v2405 = vunpack.c.l.b16 %v2110
    %v2406 = vunpack.c.h.b16 %v2110
    %v2407 = vunpack.c.l.b16 %v2111
    %v2408 = vunpack.c.h.b16 %v2111
    %v2409 = vunpack.c.l.b16 %v2112
    %v2410 = vunpack.c.h.b16 %v2112
    %v2411 = vunpack.c.l.b16 %v2113
    %v2412 = vunpack.c.h.b16 %v2113
    %v2413 = vunpack.c.l.b16 %v2114
    %v2414 = vunpack.c.h.b16 %v2114
    %v2415 = vunpack.c.l.b16 %v2115
    %v2416 = vunpack.c.h.b16 %v2115
    %v2417 = vunpack.c.l.b16 %v2116
    %v2418 = vunpack.c.h.b16 %v2116
    %v2419 = vunpack.c.l.b16 %v2117
    %v2420 = vunpack.c.h.b16 %v2117
    %v2421 = vunpack.c.l.b16 %v2118
    %v2422 = vunpack.c.h.b16 %v2118
    %v2423 = vunpack.c.l.b16 %v2119
    %v2424 = vunpack.c.h.b16 %v2119
    %v2425 = vunpack.c.l.b16 %v2120
    %v2426 = vunpack.c.h.b16 %v2120
    %v2427 = vunpack.c.l.b16 %v2121
    %v2428 = vunpack.c.h.b16 %v2121
    %v2429 = vunpack.c.l.b16 %v2122
    %v2430 = vunpack.c.h.b16 %v2122
    %v2431 = vunpack.c.l.b16 %v2123
    %v2432 = vunpack.c.h.b16 %v2123
    %v2433 = vunpack.c.l.b16 %v2124
    %v2434 = vunpack.c.h.b16 %v2124
    %v2435 = vunpack.c.l.b16 %v2125
    %v2436 = vunpack.c.h.b16 %v2125
    %v2437 = vunpack.c.l.b16 %v2126
    %v2438 = vunpack.c.h.b16 %v2126
    %v2439 = vunpack.c.l.b16 %v2127
    %v2440 = vunpack.c.h.b16 %v2127
    %v2441 = vunpack.c.l.b16 %v2128
    %v2442 = vunpack.c.h.b16 %v2128
    %v2443 = vunpack.c.l.b16 %v2129
    %v2444 = vunpack.c.h.b16 %v2129
    %v2445 = vunpack.c.l.b16 %v2130
    %v2446 = vunpack.c.h.b16 %v2130
    %v2447 = vunpack.c.l.b16 %v2131
    %v2448 = vunpack.c.h.b16 %v2131
    %v2449 = vunpack.c.l.b16 %v2132
    %v2450 = vunpack.c.h.b16 %v2132
    %v2451 = vunpack.c.l.b16 %v2133
    %v2452 = vunpack.c.h.b16 %v2133
    %v2453 = vunpack.c.l.b16 %v2134
    %v2454 = vunpack.c.h.b16 %v2134
    %v2455 = vunpack.c.l.b16 %v2135
    %v2456 = vunpack.c.h.b16 %v2135
    %v2457 = vunpack.c.l.b16 %v2136
    %v2458 = vunpack.c.h.b16 %v2136
    %v2459 = vunpack.c.l.b16 %v2137
    %v2460 = vunpack.c.h.b16 %v2137
    %v2461 = vunpack.c.l.b16 %v2138
    %v2462 = vunpack.c.h.b16 %v2138
    %v2463 = vunpack.c.l.b16 %v2139
    %v2464 = vunpack.c.h.b16 %v2139
    %v2465 = vunpack.c.l.b16 %v2140
    %v2466 = vunpack.c.h.b16 %v2140
    %v2467 = vunpack.c.l.b16 %v2141
    %v2468 = vunpack.c.h.b16 %v2141
    %v2469 = vunpack.c.l.b16 %v2142
    %v2470 = vunpack.c.h.b16 %v2142
    %v2471 = vunpack.c.l.b16 %v2143
    %v2472 = vunpack.c.h.b16 %v2143
    %v2473 = vunpack.c.l.b16 %v2144
    %v2474 = vunpack.c.h.b16 %v2144
    %v2475 = vunpack.c.l.b16 %v2145
    %v2476 = vunpack.c.h.b16 %v2145
    %v2477 = vunpack.c.l.b16 %v2146
    %v2478 = vunpack.c.h.b16 %v2146
    %v2479 = vunpack.c.l.b16 %v2147
    %v2480 = vunpack.c.h.b16 %v2147
    %v2481 = vunpack.c.l.b16 %v2148
    %v2482 = vunpack.c.h.b16 %v2148
    %v2483 = vunpack.c.l.b16 %v2149
    %v2484 = vunpack.c.h.b16 %v2149
    %v2485 = vunpack.c.l.b16 %v2150
    %v2486 = vunpack.c.h.b16 %v2150
    %v2487 = vunpack.c.l.b16 %v2151
    %v2488 = vunpack.c.h.b16 %v2151
    %v2489 = vunpack.c.l.b16 %v2152
    %v2490 = vunpack.c.h.b16 %v2152
    %v2491 = vunpack.c.l.b16 %v2153
    %v2492 = vunpack.c.h.b16 %v2153
    %v2493 = vunpack.c.l.b16 %v2154
    %v2494 = vunpack.c.h.b16 %v2154
    %v2495 = vunpack.c.l.b16 %v2155
    %v2496 = vunpack.c.h.b16 %v2155
    %v2497 = vunpack.c.l.b16 %v2156
    %v2498 = vunpack.c.h.b16 %v2156
    %v2499 = vunpack.c.l.b16 %v2157
    %v2500 = vunpack.c.h.b16 %v2157
    %v2501 = vunpack.c.l.b16 %v2158
    %v2502 = vunpack.c.h.b16 %v2158
    %v2503 = vunpack.c.l.b16 %v2159
    %v2504 = vunpack.c.h.b16 %v2159
    %v2505 = vunpack.c.l.b16 %v2160
    %v2506 = vunpack.c.h.b16 %v2160
    %v2507 = vunpack.c.l.b16 %v2161
    %v2508 = vunpack.c.h.b16 %v2161
    %v2509 = vunpack.c.l.b16 %v2162
    %v2510 = vunpack.c.h.b16 %v2162
    %v2511 = vunpack.c.l.b16 %v2163
    %v2512 = vunpack.c.h.b16 %v2163
    %v2513 = vunpack.c.l.b16 %v2164
    %v2514 = vunpack.c.h.b16 %v2164
    %v2515 = vunpack.c.l.b16 %v2165
    %v2516 = vunpack.c.h.b16 %v2165
    %v2517 = vunpack.c.l.b16 %v2166
    %v2518 = vunpack.c.h.b16 %v2166
    %v2519 = vunpack.c.l.b16 %v2167
    %v2520 = vunpack.c.h.b16 %v2167
    %v2521 = vunpack.c.l.b16 %v2168
    %v2522 = vunpack.c.h.b16 %v2168
    %v2523 = vunpack.c.l.b16 %v2169
    %v2524 = vunpack.c.h.b16 %v2169
    %v2525 = vunpack.c.l.b16 %v2170
    %v2526 = vunpack.c.h.b16 %v2170
    %v2527 = vunpack.c.l.b16 %v2171
    %v2528 = vunpack.c.h.b16 %v2171
    %v2529 = vunpack.c.l.b16 %v2172
    %v2530 = vunpack.c.h.b16 %v2172
    %v2531 = vunpack.c.l.b16 %v2173
    %v2532 = vunpack.c.h.b16 %v2173
    %v2533 = vunpack.c.l.b16 %v2174
    %v2534 = vunpack.c.h.b16 %v2174
    %v2535 = vunpack.c.l.b16 %v2175
    %v2536 = vunpack.c.h.b16 %v2175
    %v2537 = vunpack.c.l.b16 %v2176
    %v2538 = vunpack.c.h.b16 %v2176
    %v2539 = vunpack.c.l.b16 %v2177
    %v2540 = vunpack.c.h.b16 %v2177
    %v2541 = vunpack.c.l.b16 %v2178
    %v2542 = vunpack.c.h.b16 %v2178
    %v2543 = vunpack.c.l.b16 %v2179
    %v2544 = vunpack.c.h.b16 %v2179
    %v2545 = vunpack.c.l.b16 %v2180
    %v2546 = vunpack.c.h.b16 %v2180
    %v2547 = vunpack.c.l.b16 %v2181
    %v2548 = vunpack.c.h.b16 %v2181
    %v2549 = vunpack.c.l.b16 %v2182
    %v2550 = vunpack.c.h.b16 %v2182
    %v2551 = vunpack.c.l.b16 %v2183
    %v2552 = vunpack.c.h.b16 %v2183
    %v2553 = vunpack.c.l.b16 %v2184
    %v2554 = vunpack.c.h.b16 %v2184
    %v2555 = vunpack.c.l.b16 %v2185
    %v2556 = vunpack.c.h.b16 %v2185
    %v2557 = vunpack.c.l.b16 %v2186
    %v2558 = vunpack.c.h.b16 %v2186
    %v2559 = vunpack.c.l.b16 %v2187
    %v2560 = vunpack.c.h.b16 %v2187
    %v2561 = vunpack.c.l.b16 %v2188
    %v2562 = vunpack.c.h.b16 %v2188
    %v2563 = vunpack.c.l.b16 %v2189
    %v2564 = vunpack.c.h.b16 %v2189
    %v2565 = vunpack.c.l.b16 %v2190
    %v2566 = vunpack.c.h.b16 %v2190
    %v2567 = vunpack.c.l.b16 %v2191
    %v2568 = vunpack.c.h.b16 %v2191
    %v2569 = vunpack.c.l.b16 %v2192
    %v2570 = vunpack.c.h.b16 %v2192
    %v2571 = vunpack.c.l.b16 %v2193
    %v2572 = vunpack.c.h.b16 %v2193
    %v2573 = vunpack.c.l.b16 %v2194
    %v2574 = vunpack.c.h.b16 %v2194
    %v2575 = vunpack.c.l.b16 %v2195
    %v2576 = vunpack.c.h.b16 %v2195
    %v2577 = vunpack.c.l.b16 %v2196
    %v2578 = vunpack.c.h.b16 %v2196
    %v2579 = vunpack.c.l.b16 %v2197
    %v2580 = vunpack.c.h.b16 %v2197
    %v2581 = vunpack.c.l.b16 %v2198
    %v2582 = vunpack.c.h.b16 %v2198
    %v2583 = vunpack.c.l.b16 %v2199
    %v2584 = vunpack.c.h.b16 %v2199
    %v2585 = vunpack.c.l.b16 %v2200
    %v2586 = vunpack.c.h.b16 %v2200
    %v2587 = vunpack.c.l.b16 %v2201
    %v2588 = vunpack.c.h.b16 %v2201
    %v2589 = vunpack.c.l.b16 %v2202
    %v2590 = vunpack.c.h.b16 %v2202
    %v2591 = vunpack.c.l.b16 %v2203
    %v2592 = vunpack.c.h.b16 %v2203
    %v2593 = vunpack.c.l.b16 %v2204
    %v2594 = vunpack.c.h.b16 %v2204
    %v2595 = vunpack.c.l.b16 %v2205
    %v2596 = vunpack.c.h.b16 %v2205
    %v2597 = vunpack.c.l.b16 %v2206
    %v2598 = vunpack.c.h.b16 %v2206
    %v2599 = vunpack.c.l.b16 %v2207
    %v2600 = vunpack.c.h.b16 %v2207
    %v2601 = vunpack.c.l.b16 %v2208
    %v2602 = vunpack.c.h.b16 %v2208
    %v2603 = vunpack.c.l.b16 %v2209
    %v2604 = vunpack.c.h.b16 %v2209
    %v2605 = vunpack.c.l.b16 %v2210
    %v2606 = vunpack.c.h.b16 %v2210
    %v2607 = vunpack.c.l.b16 %v2211
    %v2608 = vunpack.c.h.b16 %v2211
    %v2609 = vunpack.c.l.b16 %v2212
    %v2610 = vunpack.c.h.b16 %v2212
    %v2611 = vunpack.c.l.b16 %v2213
    %v2612 = vunpack.c.h.b16 %v2213
    %v2613 = vunpack.c.l.b16 %v2214
    %v2614 = vunpack.c.h.b16 %v2214
    %v2615 = vunpack.c.l.b16 %v2215
    %v2616 = vunpack.c.h.b16 %v2215
    %v2617 = vunpack.c.l.b16 %v2216
    %v2618 = vunpack.c.h.b16 %v2216
    %v2619 = vunpack.c.l.b16 %v2217
    %v2620 = vunpack.c.h.b16 %v2217
    %v2621 = vunpack.c.l.b16 %v2218
    %v2622 = vunpack.c.h.b16 %v2218
    %v2623 = vunpack.c.l.b16 %v2219
    %v2624 = vunpack.c.h.b16 %v2219
    %v2625 = vunpack.c.l.b16 %v2220
    %v2626 = vunpack.c.h.b16 %v2220
    %v2627 = vpack.c.b16 %v2375, %v2371
    %v2628 = vpack.c.b16 %v2376, %v2372
    %v2629 = vpack.c.b16 %v2377, %v2373
    %v2630 = vpack.c.b16 %v2378, %v2374
    %v2631 = vpack.c.b16 %v2383, %v2379
    %v2632 = vpack.c.b16 %v2384, %v2380
    %v2633 = vpack.c.b16 %v2385, %v2381
    %v2634 = vpack.c.b16 %v2386, %v2382
    %v2635 = vpack.c.b16 %v2391, %v2387
    %v2636 = vpack.c.b16 %v2392, %v2388
    %v2637 = vpack.c.b16 %v2393, %v2389
    %v2638 = vpack.c.b16 %v2394, %v2390
    %v2639 = vpack.c.b16 %v2399, %v2395
    %v2640 = vpack.c.b16 %v2400, %v2396
    %v2641 = vpack.c.b16 %v2401, %v2397
    %v2642 = vpack.c.b16 %v2402, %v2398
    %v2643 = vpack.c.b16 %v2407, %v2403
    %v2644 = vpack.c.b16 %v2408, %v2404
    %v2645 = vpack.c.b16 %v2409, %v2405
    %v2646 = vpack.c.b16 %v2410, %v2406
    %v2647 = vpack.c.b16 %v2415, %v2411
    %v2648 = vpack.c.b16 %v2416, %v2412
    %v2649 = vpack.c.b16 %v2417, %v2413
    %v2650 = vpack.c.b16 %v2418, %v2414
    %v2651 = vpack.c.b16 %v2423, %v2419
    %v2652 = vpack.c.b16 %v2424, %v2420
    %v2653 = vpack.c.b16 %v2425, %v2421
    %v2654 = vpack.c.b16 %v2426, %v2422
    %v2655 = vpack.c.b16 %v2431, %v2427
    %v2656 = vpack.c.b16 %v2432, %v2428
    %v2657 = vpack.c.b16 %v2433, %v2429
    %v2658 = vpack.c.b16 %v2434, %v2430
    %v2659 = vpack.c.b16 %v2439, %v2435
    %v2660 = vpack.c.b16 %v2440, %v2436
    %v2661 = vpack.c.b16 %v2441, %v2437
    %v2662 = vpack.c.b16 %v2442, %v2438
    %v2663 = vpack.c.b16 %v2447, %v2443
    %v2664 = vpack.c.b16 %v2448, %v2444
    %v2665 = vpack.c.b16 %v2449, %v2445
    %v2666 = vpack.c.b16 %v2450, %v2446
    %v2667 = vpack.c.b16 %v2455, %v2451
    %v2668 = vpack.c.b16 %v2456, %v2452
    %v2669 = vpack.c.b16 %v2457, %v2453
    %v2670 = vpack.c.b16 %v2458, %v2454
    %v2671 = vpack.c.b16 %v2463, %v2459
    %v2672 = vpack.c.b16 %v2464, %v2460
    %v2673 = vpack.c.b16 %v2465, %v2461
    %v2674 = vpack.c.b16 %v2466, %v2462
    %v2675 = vpack.c.b16 %v2471, %v2467
    %v2676 = vpack.c.b16 %v2472, %v2468
    %v2677 = vpack.c.b16 %v2473, %v2469
    %v2678 = vpack.c.b16 %v2474, %v2470
    %v2679 = vpack.c.b16 %v2479, %v2475
    %v2680 = vpack.c.b16 %v2480, %v2476
    %v2681 = vpack.c.b16 %v2481, %v2477
    %v2682 = vpack.c.b16 %v2482, %v2478
    %v2683 = vpack.c.b16 %v2487, %v2483
    %v2684 = vpack.c.b16 %v2488, %v2484
    %v2685 = vpack.c.b16 %v2489, %v2485
    %v2686 = vpack.c.b16 %v2490, %v2486
    %v2687 = vpack.c.b16 %v2495, %v2491
    %v2688 = vpack.c.b16 %v2496, %v2492
    %v2689 = vpack.c.b16 %v2497, %v2493
    %v2690 = vpack.c.b16 %v2498, %v2494
    %v2691 = vpack.c.b16 %v2503, %v2499
    %v2692 = vpack.c.b16 %v2504, %v2500
    %v2693 = vpack.c.b16 %v2505, %v2501
    %v2694 = vpack.c.b16 %v2506, %v2502
    %v2695 = vpack.c.b16 %v2511, %v2507
    %v2696 = vpack.c.b16 %v2512, %v2508
    %v2697 = vpack.c.b16 %v2513, %v2509
    %v2698 = vpack.c.b16 %v2514, %v2510
    %v2699 = vpack.c.b16 %v2519, %v2515
    %v2700 = vpack.c.b16 %v2520, %v2516
    %v2701 = vpack.c.b16 %v2521, %v2517
    %v2702 = vpack.c.b16 %v2522, %v2518
    %v2703 = vpack.c.b16 %v2527, %v2523
    %v2704 = vpack.c.b16 %v2528, %v2524
    %v2705 = vpack.c.b16 %v2529, %v2525
    %v2706 = vpack.c.b16 %v2530, %v2526
    %v2707 = vpack.c.b16 %v2535, %v2531
    %v2708 = vpack.c.b16 %v2536, %v2532
    %v2709 = vpack.c.b16 %v2537, %v2533
    %v2710 = vpack.c.b16 %v2538, %v2534
    %v2711 = vpack.c.b16 %v2543, %v2539
    %v2712 = vpack.c.b16 %v2544, %v2540
    %v2713 = vpack.c.b16 %v2545, %v2541
    %v2714 = vpack.c.b16 %v2546, %v2542
    %v2715 = vpack.c.b16 %v2551, %v2547
    %v2716 = vpack.c.b16 %v2552, %v2548
    %v2717 = vpack.c.b16 %v2553, %v2549
    %v2718 = vpack.c.b16 %v2554, %v2550
    %v2719 = vpack.c.b16 %v2559, %v2555
    %v2720 = vpack.c.b16 %v2560, %v2556
    %v2721 = vpack.c.b16 %v2561, %v2557
    %v2722 = vpack.c.b16 %v2562, %v2558
    %v2723 = vpack.c.b16 %v2567, %v2563
    %v2724 = vpack.c.b16 %v2568, %v2564
    %v2725 = vpack.c.b16 %v2569, %v2565
    %v2726 = vpack.c.b16 %v2570, %v2566
    %v2727 = vpack.c.b16 %v2575, %v2571
    %v2728 = vpack.c.b16 %v2576, %v2572
    %v2729 = vpack.c.b16 %v2577, %v2573
    %v2730 = vpack.c.b16 %v2578, %v2574
    %v2731 = vpack.c.b16 %v2583, %v2579
    %v2732 = vpack.c.b16 %v2584, %v2580
    %v2733 = vpack.c.b16 %v2585, %v2581
    %v2734 = vpack.c.b16 %v2586, %v2582
    %v2735 = vpack.c.b16 %v2591, %v2587
    %v2736 = vpack.c.b16 %v2592, %v2588
    %v2737 = vpack.c.b16 %v2593, %v2589
    %v2738 = vpack.c.b16 %v2594, %v2590
    %v2739 = vpack.c.b16 %v2599, %v2595
    %v2740 = vpack.c.b16 %v2600, %v2596
    %v2741 = vpack.c.b16 %v2601, %v2597
    %v2742 = vpack.c.b16 %v2602, %v2598
    %v2743 = vpack.c.b16 %v2607, %v2603
    %v2744 = vpack.c.b16 %v2608, %v2604
    %v2745 = vpack.c.b16 %v2609, %v2605
    %v2746 = vpack.c.b16 %v2610, %v2606
    %v2747 = vpack.c.b16 %v2615, %v2611
    %v2748 = vpack.c.b16 %v2616, %v2612
    %v2749 = vpack.c.b16 %v2617, %v2613
    %v2750 = vpack.c.b16 %v2618, %v2614
    %v2751 = vpack.c.b16 %v2623, %v2619
    %v2752 = vpack.c.b16 %v2624, %v2620
    %v2753 = vpack.c.b16 %v2625, %v2621
    %v2754 = vpack.c.b16 %v2626, %v2622
    %2883 = vmatprep.subr.bf16.mxu0 %v2656
    %2884 = vmatpush1.bf16.msra.mxu0 %v2655
    %2885 = vmatprep.subr.bf16.mxu0 %v2652
    %2886 = vmatpush1.bf16.msra.mxu0 %v2651
    %2887 = vmatprep.subr.bf16.mxu0 %v2648
    %2888 = vmatpush1.bf16.msra.mxu0 %v2647
    %2889 = vmatprep.subr.bf16.mxu0 %v2644
    %2890 = vmatpush1.bf16.msra.mxu0 %v2643
    %2891 = vmatprep.subr.bf16.mxu0 %v2640
    %2892 = vmatpush1.bf16.msra.mxu0 %v2639
    %2893 = vmatprep.subr.bf16.mxu0 %v2636
    %2894 = vmatpush1.bf16.msra.mxu0 %v2635
    %2895 = vmatprep.subr.bf16.mxu0 %v2632
    %2896 = vmatpush1.bf16.msra.mxu0 %v2631
    %2897 = vmatprep.subr.bf16.mxu0 %v2628
    %2898 = vmatpush1.bf16.msra.mxu0 %v2627
    %2899 = vmatprep.subr.bf16.mxu0 %v2688
    %2900 = vmatpush2.bf16.msra.mxu0 %v2687
    %2901 = vmatprep.subr.bf16.mxu0 %v2684
    %2902 = vmatpush2.bf16.msra.mxu0 %v2683
    %2903 = vmatprep.subr.bf16.mxu0 %v2680
    %2904 = vmatpush2.bf16.msra.mxu0 %v2679
    %2905 = vmatprep.subr.bf16.mxu0 %v2676
    %2906 = vmatpush2.bf16.msra.mxu0 %v2675
    %2907 = vmatprep.subr.bf16.mxu0 %v2672
    %2908 = vmatpush2.bf16.msra.mxu0 %v2671
    %2909 = vmatprep.subr.bf16.mxu0 %v2668
    %2910 = vmatpush2.bf16.msra.mxu0 %v2667
    %2911 = vmatprep.subr.bf16.mxu0 %v2664
    %2912 = vmatpush2.bf16.msra.mxu0 %v2663
    %2913 = vmatprep.subr.bf16.mxu0 %v2660
    %2914 = vmatpush2.bf16.msra.mxu0 %v2659
    %2915 = vmatprep.mubr.bf16.mxu0 %v2086
    %2916 = vmatmul.mubr.bf16.gmra.mxu0 %v2085
    %v2917 = vpop.f32.mrf.mxu0
    %v2918 = vadd.f32 %v2226, %v2917
    %v2919 = vpop.f32.mrf.mxu0
    %v2920 = vadd.f32 %v2230, %v2919
    %v2921 = vpop.f32.mrf.mxu0
    %v2922 = vpop.f32.mrf.mxu0
    %2923 = vdwg.mxu0
    %2924 = vmatprep.subr.bf16.mxu0 %v2720
    %2925 = vmatpush1.bf16.msra.mxu0 %v2719
    %2926 = vmatprep.subr.bf16.mxu0 %v2716
    %2927 = vmatpush1.bf16.msra.mxu0 %v2715
    %2928 = vmatprep.subr.bf16.mxu0 %v2712
    %2929 = vmatpush1.bf16.msra.mxu0 %v2711
    %2930 = vmatprep.subr.bf16.mxu0 %v2708
    %2931 = vmatpush1.bf16.msra.mxu0 %v2707
    %2932 = vmatprep.subr.bf16.mxu0 %v2704
    %2933 = vmatpush1.bf16.msra.mxu0 %v2703
    %2934 = vmatprep.subr.bf16.mxu0 %v2700
    %2935 = vmatpush1.bf16.msra.mxu0 %v2699
    %2936 = vmatprep.subr.bf16.mxu0 %v2696
    %2937 = vmatpush1.bf16.msra.mxu0 %v2695
    %2938 = vmatprep.subr.bf16.mxu0 %v2692
    %2939 = vmatpush1.bf16.msra.mxu0 %v2691
    %2940 = vmatprep.subr.bf16.mxu0 %v2752
    %2941 = vmatpush2.bf16.msra.mxu0 %v2751
    %2942 = vmatprep.subr.bf16.mxu0 %v2748
    %2943 = vmatpush2.bf16.msra.mxu0 %v2747
    %2944 = vmatprep.subr.bf16.mxu0 %v2744
    %2945 = vmatpush2.bf16.msra.mxu0 %v2743
    %2946 = vmatprep.subr.bf16.mxu0 %v2740
    %2947 = vmatpush2.bf16.msra.mxu0 %v2739
    %2948 = vmatprep.subr.bf16.mxu0 %v2736
    %2949 = vmatpush2.bf16.msra.mxu0 %v2735
    %2950 = vmatprep.subr.bf16.mxu0 %v2732
    %2951 = vmatpush2.bf16.msra.mxu0 %v2731
    %2952 = vmatprep.subr.bf16.mxu0 %v2728
    %2953 = vmatpush2.bf16.msra.mxu0 %v2727
    %2954 = vmatprep.subr.bf16.mxu0 %v2724
    %2955 = vmatpush2.bf16.msra.mxu0 %v2723
    %2956 = vmatprep.mubr.bf16.mxu0 %v2088
    %2957 = vmatmul.mubr.bf16.gmra.mxu0 %v2087
    %v2958 = vpop.f32.mrf.mxu0
    %v2959 = vadd.f32 %v2918, %v2958
    %v2960 = vpop.f32.mrf.mxu0
    %v2961 = vadd.f32 %v2920, %v2960
    %v2962 = vpop.f32.mrf.mxu0
    %v2963 = vpop.f32.mrf.mxu0
    %2964 = vdwg.mxu0
    %2965 = vmatprep.subr.bf16.mxu0 %v2658
    %2966 = vmatpush1.bf16.msra.mxu0 %v2657
    %2967 = vmatprep.subr.bf16.mxu0 %v2654
    %2968 = vmatpush1.bf16.msra.mxu0 %v2653
    %2969 = vmatprep.subr.bf16.mxu0 %v2650
    %2970 = vmatpush1.bf16.msra.mxu0 %v2649
    %2971 = vmatprep.subr.bf16.mxu0 %v2646
    %2972 = vmatpush1.bf16.msra.mxu0 %v2645
    %2973 = vmatprep.subr.bf16.mxu0 %v2642
    %2974 = vmatpush1.bf16.msra.mxu0 %v2641
    %2975 = vmatprep.subr.bf16.mxu0 %v2638
    %2976 = vmatpush1.bf16.msra.mxu0 %v2637
    %2977 = vmatprep.subr.bf16.mxu0 %v2634
    %2978 = vmatpush1.bf16.msra.mxu0 %v2633
    %2979 = vmatprep.subr.bf16.mxu0 %v2630
    %2980 = vmatpush1.bf16.msra.mxu0 %v2629
    %2981 = vmatprep.subr.bf16.mxu0 %v2690
    %2982 = vmatpush2.bf16.msra.mxu0 %v2689
    %2983 = vmatprep.subr.bf16.mxu0 %v2686
    %2984 = vmatpush2.bf16.msra.mxu0 %v2685
    %2985 = vmatprep.subr.bf16.mxu0 %v2682
    %2986 = vmatpush2.bf16.msra.mxu0 %v2681
    %2987 = vmatprep.subr.bf16.mxu0 %v2678
    %2988 = vmatpush2.bf16.msra.mxu0 %v2677
    %2989 = vmatprep.subr.bf16.mxu0 %v2674
    %2990 = vmatpush2.bf16.msra.mxu0 %v2673
    %2991 = vmatprep.subr.bf16.mxu0 %v2670
    %2992 = vmatpush2.bf16.msra.mxu0 %v2669
    %2993 = vmatprep.subr.bf16.mxu0 %v2666
    %2994 = vmatpush2.bf16.msra.mxu0 %v2665
    %2995 = vmatprep.subr.bf16.mxu0 %v2662
    %2996 = vmatpush2.bf16.msra.mxu0 %v2661
    %2997 = vmatprep.mubr.bf16.mxu0 %v2086
    %2998 = vmatmul.mubr.bf16.gmra.mxu0 %v2085
    %v2999 = vpop.f32.mrf.mxu0
    %v3000 = vadd.f32 %v2234, %v2999
    %v3001 = vpop.f32.mrf.mxu0
    %v3002 = vadd.f32 %v2238, %v3001
    %v3003 = vpop.f32.mrf.mxu0
    %v3004 = vpop.f32.mrf.mxu0
    %3005 = vdwg.mxu0
    %3006 = vmatprep.subr.bf16.mxu0 %v2722
    %3007 = vmatpush1.bf16.msra.mxu0 %v2721
    %3008 = vmatprep.subr.bf16.mxu0 %v2718
    %3009 = vmatpush1.bf16.msra.mxu0 %v2717
    %3010 = vmatprep.subr.bf16.mxu0 %v2714
    %3011 = vmatpush1.bf16.msra.mxu0 %v2713
    %3012 = vmatprep.subr.bf16.mxu0 %v2710
    %3013 = vmatpush1.bf16.msra.mxu0 %v2709
    %3014 = vmatprep.subr.bf16.mxu0 %v2706
    %3015 = vmatpush1.bf16.msra.mxu0 %v2705
    %3016 = vmatprep.subr.bf16.mxu0 %v2702
    %3017 = vmatpush1.bf16.msra.mxu0 %v2701
    %3018 = vmatprep.subr.bf16.mxu0 %v2698
    %3019 = vmatpush1.bf16.msra.mxu0 %v2697
    %3020 = vmatprep.subr.bf16.mxu0 %v2694
    %3021 = vmatpush1.bf16.msra.mxu0 %v2693
    %3022 = vmatprep.subr.bf16.mxu0 %v2754
    %3023 = vmatpush2.bf16.msra.mxu0 %v2753
    %3024 = vmatprep.subr.bf16.mxu0 %v2750
    %3025 = vmatpush2.bf16.msra.mxu0 %v2749
    %3026 = vmatprep.subr.bf16.mxu0 %v2746
    %3027 = vmatpush2.bf16.msra.mxu0 %v2745
    %3028 = vmatprep.subr.bf16.mxu0 %v2742
    %3029 = vmatpush2.bf16.msra.mxu0 %v2741
    %3030 = vmatprep.subr.bf16.mxu0 %v2738
    %3031 = vmatpush2.bf16.msra.mxu0 %v2737
    %3032 = vmatprep.subr.bf16.mxu0 %v2734
    %3033 = vmatpush2.bf16.msra.mxu0 %v2733
    %3034 = vmatprep.subr.bf16.mxu0 %v2730
    %3035 = vmatpush2.bf16.msra.mxu0 %v2729
    %3036 = vmatprep.subr.bf16.mxu0 %v2726
    %3037 = vmatpush2.bf16.msra.mxu0 %v2725
    %3038 = vmatprep.mubr.bf16.mxu0 %v2088
    %3039 = vmatmul.mubr.bf16.gmra.mxu0 %v2087
    %v3040 = vpop.f32.mrf.mxu0
    %v3041 = vadd.f32 %v3000, %v3040
    %v3042 = vpop.f32.mrf.mxu0
    %v3043 = vadd.f32 %v3002, %v3042
    %v3044 = vpop.f32.mrf.mxu0
    %v3045 = vpop.f32.mrf.mxu0
    %3046 = vdwg.mxu0
    %3047 = vst [vmem:[#allocation10] sm:$0xff] %v2959
    %3048 = vst [vmem:[#allocation10 + $0x8] sm:$0xff] %v2961
    %3049 = vst [vmem:[#allocation10 + $0x10] sm:$0xff] %v3041
    %3050 = vst [vmem:[#allocation10 + $0x18] sm:$0xff] %v3043
    // Predicated region
    $region86: #{_predictor_forward_jit.1} parent=1 // pred_check
      _
    $region87: #{_predictor_forward_jit.1} parent=1 // pred_check_branch
      %3052 = sbr.rel (0) target = $region89
    $region88: #{_predictor_forward_jit.1} parent=1 // pred_region
      %s3054 = ssub.s32 512, 512
      %3055 = vsyncadd [#allocation9], %s3054
      %s3057 = sshll.u32 [#allocation10], 4
      %s3058 = int_to_ptr.vmem [resolvable:$true] %s3057
      %3060 = dma.vmem_to_hbm [thread:$0]  %s3058, 512, %s7, [#allocation9]
    $region89: #{_predictor_forward_jit.1} parent=1 // pred_fallthru
      _
    // Predicated region
    $region90: #{_predictor_forward_jit.1} parent=1 // pred_check
      _
    $region91: #{_predictor_forward_jit.1} parent=1 // pred_check_branch
      %3062 = sbr.rel (0) target = $region93
    $region92: #{_predictor_forward_jit.1} parent=1 // pred_region
      %3063 = dma.done [#allocation9], 512
    $region93: #{_predictor_forward_jit.1} parent=1 // pred_fallthru
      _
    %3064 = vsyncpa [#allocation8], 1
    %3065 = vsyncpa [#allocation9], 1
  %3066 = vsyncmov [#allocation6]
  %s3067 = vpop.sfrf %3066
  %p3068 = scmp.eq.s32.totalorder %s3067, 0
  %p3069 = pneg %p3068
  %3071 = shalt.err (%p3069)
  %s3072 = scalar_lea.sflag [#allocation6], 1
  %3073 = vsyncmov %s3072
  %s3074 = vpop.sfrf %3073
  %p3075 = scmp.eq.s32.totalorder %s3074, 0
  %p3076 = pneg %p3075
  %3078 = shalt.err (%p3076)
  %s3079 = scalar_lea.sflag [#allocation6], 2
  %3080 = vsyncmov %s3079
  %s3081 = vpop.sfrf %3080
  %p3082 = scmp.eq.s32.totalorder %s3081, 0
  %p3083 = pneg %p3082
  %3085 = shalt.err (%p3083)
  %s3086 = scalar_lea.sflag [#allocation6], 3
  %3087 = vsyncmov %s3086
  %s3088 = vpop.sfrf %3087
  %p3089 = scmp.eq.s32.totalorder %s3088, 0
  %p3090 = pneg %p3089
  %3092 = shalt.err (%p3090)

</llo_original>
